<compile_context>
chip_gen: v7x
topology: tpu7x:2x2x1
jax: 0.10.0
libtpu: 0.0.40
codegen_flags: <defaults>
</compile_context>

<pallas_src>
import functools
import math

import jax
import jax.numpy as jnp
from jax import lax
from jax.experimental import pallas as pl
from jax.experimental.pallas import tpu as pltpu

LOG_2PI = math.log(2.0 * math.pi)


def qc_kernel(pemb_ref, eps_ref, wemb_ref, bemb_ref, wcat_ref, bcat_ref,
              c_ref, lp_ref,
              p2_ref,
              *, H, W, C, K):
    HW = H * W

    # ---- embc: Conv2d(1 -> 10, k=5, causal pad), views pre-averaged ---------
    # (C, K*K) @ (K*K, H*W) -> (C, H*W) on the MXU, then bias + ReLU.
    emb = jnp.dot(wemb_ref[...], pemb_ref[0],
                  preferred_element_type=jnp.float32)              # (C, HW)
    emb = jnp.maximum(emb + bemb_ref[...], 0.0)

    # ---- channel-major im2col of the causally padded embedding --------------
    # P2[t*C + ci, p] = padded_emb[ci, y_p + dy, x_p + dx]
    #                 = emb[ci, p - s_t]  (masked), with s_t=(K-1-dy)*W+(K-1-dx).
    # The "shift" is realized as a lane-offset store into a zeroed scratch; the
    # column mask kills the within-row wraparound terms.  No reshapes needed.
    p2_ref[...] = jnp.zeros_like(p2_ref)
    col = lax.broadcasted_iota(jnp.int32, (C, HW), 1) % W          # x-coordinate
    # Mask depends only on dx -> build the K masked copies of emb once (hoisted).
    membs = [jnp.where(col < (W - (K - 1 - dx)), emb, 0.0) for dx in range(K)]
    for dy in range(K):
        for dx in range(K):
            t = dy * K + dx
            s = (K - 1 - dy) * W + (K - 1 - dx)
            p2_ref[t * C:(t + 1) * C, s:] = membs[dx][:, :HW - s]

    # ---- fused conv_mu|conv_sigma: one (2C, K*K*C) x (K*K*C, H*W) matmul ----
    out = jnp.dot(wcat_ref[...], p2_ref[...],
                  preferred_element_type=jnp.float32) + bcat_ref[...]  # (2C, HW)
    mu = out[:C]
    sg = out[C:]

    # Softplus (torch.nn.Softplus: beta=1, threshold=20).  Guarded log(1+exp)
    # matches the reference within tolerance at these magnitudes; log1p would
    # only matter for sg << -16, unreachable with this init.
    sigma = jnp.where(sg > 20.0, sg, jnp.log(1.0 + jnp.exp(jnp.minimum(sg, 20.0))))

    # ---- rsample + Normal log_prob ------------------------------------------
    eps = eps_ref[0]                                                # (C, HW)
    c = mu + sigma * eps
    c_ref[0] = c                                                    # lane-dense store

    # z = (c - mu) / sigma == eps analytically -> no subtract / divide needed.
    lp = -0.5 * (eps * eps) - jnp.log(sigma) - 0.5 * LOG_2PI
    lp_ref[...] = jnp.broadcast_to(jnp.sum(lp), (1, 1, 128))


def qc_forward(x, eps, params):
    """x: (B, N, 1, H, W) float32, eps: (B, C, H, W) float32 (NCHW noise)."""
    w_emb, b_emb, w_mu, b_mu, w_sg, b_sg = params
    B, N, _, H, W = x.shape
    K = w_emb.shape[0]
    C = w_emb.shape[2]
    HW = H * W
    KK = K * K

    # ---- wrapper-side layout plumbing (no compute hoisted beyond linearity) --
    x_mean = jnp.mean(x[:, :, 0, :, :], axis=1)                     # mean over views
    xp = jnp.pad(x_mean, ((0, 0), (K - 1, 0), (K - 1, 0)))          # causal zero-pad
    cols = [xp[:, dy:dy + H, dx:dx + W].reshape(B, 1, HW)
            for dy in range(K) for dx in range(K)]
    pembT = jnp.concatenate(cols, axis=1)                           # (B, K*K, H*W)

    epsT = eps.reshape(B, C, HW)                                    # channel-major

    # MXU-ready, pre-flattened / fused weights.
    w_embT = w_emb.reshape(KK, C).T                                 # (C, K*K)
    b_embB = jnp.broadcast_to(b_emb.reshape(C, 1), (C, HW))
    w_cat = jnp.concatenate([w_mu.reshape(KK * C, C),
                             w_sg.reshape(KK * C, C)], axis=1)      # (K*K*C, 2C)
    w_catT = w_cat.T                                                # (2C, K*K*C)
    b_cat = jnp.concatenate([b_mu.reshape(C), b_sg.reshape(C)])
    b_catB = jnp.broadcast_to(b_cat.reshape(2 * C, 1), (2 * C, HW))

    kernel = functools.partial(qc_kernel, H=H, W=W, C=C, K=K)

    c_cm, lp = pl.pallas_call(
        kernel,
        out_shape=(jax.ShapeDtypeStruct((B, C, HW), jnp.float32),
                   jax.ShapeDtypeStruct((B, 1, 128), jnp.float32)),
        grid_spec=pltpu.PrefetchScalarGridSpec(
            num_scalar_prefetch=0,
            grid=(B,),
            in_specs=[
                pl.BlockSpec((1, KK, HW), lambda b: (b, 0, 0)),     # im2col(x_mean)
                pl.BlockSpec((1, C, HW), lambda b: (b, 0, 0)),      # eps (channel-major)
                pl.BlockSpec((C, KK), lambda b: (0, 0)),            # w_emb^T
                pl.BlockSpec((C, HW), lambda b: (0, 0)),            # b_emb broadcast
                pl.BlockSpec((2 * C, KK * C), lambda b: (0, 0)),    # [w_mu|w_sg]^T
                pl.BlockSpec((2 * C, HW), lambda b: (0, 0)),        # [b_mu|b_sg] broadcast
            ],
            out_specs=[
                pl.BlockSpec((1, C, HW), lambda b: (b, 0, 0)),      # c (channel-major)
                pl.BlockSpec((1, 1, 128), lambda b: (b, 0, 0)),     # logp (lane-replicated)
            ],
            scratch_shapes=[
                pltpu.VMEM((KK * C, HW), jnp.float32),              # im2col of emb
            ],
        ),
        compiler_params=pltpu.CompilerParams(
            dimension_semantics=("parallel",)),                     # 2 TCs on v7x
    )(pembT, epsT, w_embT, b_embB, w_catT, b_catB)

    c = c_cm.reshape(B, C, H, W)        # already NCHW — no transpose needed
    return c, lp[:, 0, 0]


def ref_forward(x, eps, params):
    """Pure-JAX reference mirroring the torch module (for correctness check)."""
    w_emb, b_emb, w_mu, b_mu, w_sg, b_sg = params
    B, N, _, H, W = x.shape
    K, C = w_emb.shape[0], w_emb.shape[2]
    xs = x[:, :, 0]
    xp = jnp.pad(xs, ((0, 0), (0, 0), (K - 1, 0), (K - 1, 0)))
    emb = jnp.zeros((B, H, W, C), jnp.float32)
    for dy in range(K):
        for dx in range(K):
            emb = emb + jnp.einsum('bnhw,c->bhwc',
                                   xp[:, :, dy:dy + H, dx:dx + W], w_emb[dy, dx])
    emb = jax.nn.relu(emb / N + b_emb.reshape(1, 1, 1, C))
    ep = jnp.pad(emb, ((0, 0), (K - 1, 0), (K - 1, 0), (0, 0)))
    mu = jnp.zeros((B, H, W, C), jnp.float32) + b_mu.reshape(1, 1, 1, C)
    sg = jnp.zeros((B, H, W, C), jnp.float32) + b_sg.reshape(1, 1, 1, C)
    for dy in range(K):
        for dx in range(K):
            p = ep[:, dy:dy + H, dx:dx + W, :]
            mu = mu + jnp.einsum('bhwi,io->bhwo', p, w_mu[dy, dx])
            sg = sg + jnp.einsum('bhwi,io->bhwo', p, w_sg[dy, dx])
    sigma = jnp.where(sg > 20.0, sg, jnp.log1p(jnp.exp(jnp.minimum(sg, 20.0))))
    mu = jnp.transpose(mu, (0, 3, 1, 2))            # NCHW
    sigma = jnp.transpose(sigma, (0, 3, 1, 2))
    c = mu + sigma * eps
    lp = -0.5 * ((c - mu) / sigma) ** 2 - jnp.log(sigma) - 0.5 * LOG_2PI
    return c, jnp.sum(lp, axis=(1, 2, 3))


if __name__ == "__main__":
    B, N, H, W = 2, 3, 16, 16
    K, C = 5, 10

    key = jax.random.PRNGKey(0)
    ks = jax.random.split(key, 8)
    bound1 = 1.0 / math.sqrt(1 * K * K)     # PyTorch Conv2d default init bound (fan_in)
    bound2 = 1.0 / math.sqrt(C * K * K)
    w_emb = jax.random.uniform(ks[0], (K, K, C), jnp.float32, -bound1, bound1)
    b_emb = jax.random.uniform(ks[1], (1, C), jnp.float32, -bound1, bound1)
    w_mu = jax.random.uniform(ks[2], (K, K, C, C), jnp.float32, -bound2, bound2)
    b_mu = jax.random.uniform(ks[3], (1, C), jnp.float32, -bound2, bound2)
    w_sg = jax.random.uniform(ks[4], (K, K, C, C), jnp.float32, -bound2, bound2)
    b_sg = jax.random.uniform(ks[5], (1, C), jnp.float32, -bound2, bound2)
    params = (w_emb, b_emb, w_mu, b_mu, w_sg, b_sg)
    # TODO(synk): fc_loc (Linear 90->32->6) exists in __init__ but is never used in
    # forward(), so it is intentionally not materialized here.

    x = jax.random.normal(ks[6], (B, N, 1, H, W), jnp.float32)
    eps = jax.random.normal(ks[7], (B, C, H, W), jnp.float32)  # Normal.rsample noise

    c, lp = qc_forward(x, eps, params)
    jax.block_until_ready((c, lp))

    c_ref, lp_ref = ref_forward(x, eps, params)
    assert jnp.allclose(c, c_ref, atol=5e-4, rtol=5e-4), \
        float(jnp.max(jnp.abs(c - c_ref)))
    assert jnp.allclose(lp, lp_ref, atol=5e-3, rtol=1e-3), \
        float(jnp.max(jnp.abs(lp - lp_ref)))

    print("KERNEL_OK")
</pallas_src>

<mosaic_0001>
module attributes {stable_mosaic.version = 11 : i64} {
  func.func @qc_kernel(%arg0: i32, %arg1: memref<1x25x256xf32, #tpu.memory_space<vmem>>, %arg2: memref<1x10x256xf32, #tpu.memory_space<vmem>>, %arg3: memref<10x25xf32, #tpu.memory_space<vmem>>, %arg4: memref<10x256xf32, #tpu.memory_space<vmem>>, %arg5: memref<20x250xf32, #tpu.memory_space<vmem>>, %arg6: memref<20x256xf32, #tpu.memory_space<vmem>>, %arg7: memref<1x10x256xf32, #tpu.memory_space<vmem>>, %arg8: memref<1x1x128xf32, #tpu.memory_space<vmem>>, %arg9: memref<250x256xf32, #tpu.memory_space<vmem>>) attributes {dimension_semantics = [#tpu.dimension_semantics<parallel>], iteration_bounds = array<i64: 2>, scalar_prefetch = 0 : i64, scratch_operands = 1 : i64, tpu.core_type = #tpu.core_type<tc>, window_params = [{transform_indices = @transform_0, window_bounds = array<i64: 1, 25, 256>}, {transform_indices = @transform_1, window_bounds = array<i64: 1, 10, 256>}, {pipeline_mode = #tpu.pipeline_mode<synchronous>, transform_indices = @transform_2, window_bounds = array<i64: 10, 25>}, {pipeline_mode = #tpu.pipeline_mode<synchronous>, transform_indices = @transform_3, window_bounds = array<i64: 10, 256>}, {pipeline_mode = #tpu.pipeline_mode<synchronous>, transform_indices = @transform_4, window_bounds = array<i64: 20, 250>}, {pipeline_mode = #tpu.pipeline_mode<synchronous>, transform_indices = @transform_5, window_bounds = array<i64: 20, 256>}, {transform_indices = @transform_6, window_bounds = array<i64: 1, 10, 256>}, {transform_indices = @transform_7, window_bounds = array<i64: 1, 1, 128>}]} {
    %c0 = arith.constant 0 : index
    %c0_0 = arith.constant 0 : index
    %0 = vector.load %arg3[%c0, %c0_0] : memref<10x25xf32, #tpu.memory_space<vmem>>, vector<10x25xf32>
    %c0_1 = arith.constant 0 : index
    %c0_2 = arith.constant 0 : index
    %c0_3 = arith.constant 0 : index
    %1 = vector.load %arg1[%c0_1, %c0_2, %c0_3] : memref<1x25x256xf32, #tpu.memory_space<vmem>>, vector<1x25x256xf32>
    %2 = vector.shape_cast %1 : vector<1x25x256xf32> to vector<25x256xf32>
    %cst = arith.constant dense<0.000000e+00> : vector<10x256xf32>
    %3 = tpu.matmul %0, %2, %cst {dimension_numbers = #tpu.dot_dimension_numbers<[1], [0], [0], [1], [0, 0, 1, 1], [], []>} : vector<10x25xf32>, vector<25x256xf32>, vector<10x256xf32> -> vector<10x256xf32>
    %c0_4 = arith.constant 0 : index
    %c0_5 = arith.constant 0 : index
    %4 = vector.load %arg4[%c0_4, %c0_5] : memref<10x256xf32, #tpu.memory_space<vmem>>, vector<10x256xf32>
    %5 = arith.addf %3, %4 : vector<10x256xf32>
    %cst_6 = arith.constant 0.000000e+00 : f32
    %6 = vector.broadcast %cst_6 : f32 to vector<10x256xf32>
    %7 = arith.maximumf %5, %6 : vector<10x256xf32>
    %cst_7 = arith.constant 0.000000e+00 : f32
    %8 = vector.broadcast %cst_7 : f32 to vector<250x256xf32>
    %c0_8 = arith.constant 0 : index
    %c0_9 = arith.constant 0 : index
    %9 = vector.load %arg9[%c0_8, %c0_9] : memref<250x256xf32, #tpu.memory_space<vmem>>, vector<250x256xf32>
    tpu.vector_store %arg9[%c0_8, %c0_9], %8 {strides = array<i32>} : memref<250x256xf32, #tpu.memory_space<vmem>>, vector<250x256xf32>,
    %10 = tpu.iota {dimensions = array<i32: 1>} : vector<10x256xi32>
    %c16_i32 = arith.constant 16 : i32
    %c0_i32 = arith.constant 0 : i32
    %11 = arith.cmpi eq, %c16_i32, %c0_i32 : i32
    %c1_i32 = arith.constant 1 : i32
    %12 = arith.select %11, %c1_i32, %c16_i32 : i32
    %13 = vector.broadcast %12 : i32 to vector<10x256xi32>
    %14 = arith.remsi %10, %13 : vector<10x256xi32>
    %c0_i32_10 = arith.constant 0 : i32
    %15 = vector.broadcast %c0_i32_10 : i32 to vector<10x256xi32>
    %16 = arith.cmpi ne, %14, %15 : vector<10x256xi32>
    %c0_i32_11 = arith.constant 0 : i32
    %17 = vector.broadcast %c0_i32_11 : i32 to vector<10x256xi32>
    %18 = arith.cmpi slt, %14, %17 : vector<10x256xi32>
    %c0_i32_12 = arith.constant 0 : i32
    %19 = arith.cmpi slt, %12, %c0_i32_12 : i32
    %20 = vector.broadcast %19 : i1 to vector<10x256xi1>
    %21 = vector.broadcast %20 : vector<10x256xi1> to vector<10x256xi1>
    %22 = arith.xori %18, %21 : vector<10x256xi1>
    %23 = arith.andi %22, %16 : vector<10x256xi1>
    %24 = vector.broadcast %12 : i32 to vector<10x256xi32>
    %25 = arith.addi %14, %24 : vector<10x256xi32>
    %26 = arith.select %23, %25, %14 : vector<10x256xi1>, vector<10x256xi32>
    %c12_i32 = arith.constant 12 : i32
    %27 = vector.broadcast %c12_i32 : i32 to vector<10x256xi32>
    %28 = arith.cmpi slt, %26, %27 : vector<10x256xi32>
    %cst_13 = arith.constant 0.000000e+00 : f32
    %29 = vector.broadcast %cst_13 : f32 to vector<10x256xf32>
    %30 = arith.select %28, %7, %29 : vector<10x256xi1>, vector<10x256xf32>
    %c13_i32 = arith.constant 13 : i32
    %31 = vector.broadcast %c13_i32 : i32 to vector<10x256xi32>
    %32 = arith.cmpi slt, %26, %31 : vector<10x256xi32>
    %cst_14 = arith.constant 0.000000e+00 : f32
    %33 = vector.broadcast %cst_14 : f32 to vector<10x256xf32>
    %34 = arith.select %32, %7, %33 : vector<10x256xi1>, vector<10x256xf32>
    %c14_i32 = arith.constant 14 : i32
    %35 = vector.broadcast %c14_i32 : i32 to vector<10x256xi32>
    %36 = arith.cmpi slt, %26, %35 : vector<10x256xi32>
    %cst_15 = arith.constant 0.000000e+00 : f32
    %37 = vector.broadcast %cst_15 : f32 to vector<10x256xf32>
    %38 = arith.select %36, %7, %37 : vector<10x256xi1>, vector<10x256xf32>
    %c15_i32 = arith.constant 15 : i32
    %39 = vector.broadcast %c15_i32 : i32 to vector<10x256xi32>
    %40 = arith.cmpi slt, %26, %39 : vector<10x256xi32>
    %cst_16 = arith.constant 0.000000e+00 : f32
    %41 = vector.broadcast %cst_16 : f32 to vector<10x256xf32>
    %42 = arith.select %40, %7, %41 : vector<10x256xi1>, vector<10x256xf32>
    %c16_i32_17 = arith.constant 16 : i32
    %43 = vector.broadcast %c16_i32_17 : i32 to vector<10x256xi32>
    %44 = arith.cmpi slt, %26, %43 : vector<10x256xi32>
    %cst_18 = arith.constant 0.000000e+00 : f32
    %45 = vector.broadcast %cst_18 : f32 to vector<10x256xf32>
    %46 = arith.select %44, %7, %45 : vector<10x256xi1>, vector<10x256xf32>
    %47 = vector.extract_strided_slice %30 {offsets = [0, 0], sizes = [10, 188], strides = [1, 1]} : vector<10x256xf32> to vector<10x188xf32>
    %c0_19 = arith.constant 0 : index
    %c68 = arith.constant 68 : index
    %48 = vector.load %arg9[%c0_19, %c68] : memref<250x256xf32, #tpu.memory_space<vmem>>, vector<10x188xf32>
    tpu.vector_store %arg9[%c0_19, %c68], %47 {strides = array<i32>} : memref<250x256xf32, #tpu.memory_space<vmem>>, vector<10x188xf32>,
    %49 = vector.extract_strided_slice %34 {offsets = [0, 0], sizes = [10, 189], strides = [1, 1]} : vector<10x256xf32> to vector<10x189xf32>
    %c10 = arith.constant 10 : index
    %c67 = arith.constant 67 : index
    %50 = vector.load %arg9[%c10, %c67] : memref<250x256xf32, #tpu.memory_space<vmem>>, vector<10x189xf32>
    tpu.vector_store %arg9[%c10, %c67], %49 {strides = array<i32>} : memref<250x256xf32, #tpu.memory_space<vmem>>, vector<10x189xf32>,
    %51 = vector.extract_strided_slice %38 {offsets = [0, 0], sizes = [10, 190], strides = [1, 1]} : vector<10x256xf32> to vector<10x190xf32>
    %c20 = arith.constant 20 : index
    %c66 = arith.constant 66 : index
    %52 = vector.load %arg9[%c20, %c66] : memref<250x256xf32, #tpu.memory_space<vmem>>, vector<10x190xf32>
    tpu.vector_store %arg9[%c20, %c66], %51 {strides = array<i32>} : memref<250x256xf32, #tpu.memory_space<vmem>>, vector<10x190xf32>,
    %53 = vector.extract_strided_slice %42 {offsets = [0, 0], sizes = [10, 191], strides = [1, 1]} : vector<10x256xf32> to vector<10x191xf32>
    %c30 = arith.constant 30 : index
    %c65 = arith.constant 65 : index
    %54 = vector.load %arg9[%c30, %c65] : memref<250x256xf32, #tpu.memory_space<vmem>>, vector<10x191xf32>
    tpu.vector_store %arg9[%c30, %c65], %53 {strides = array<i32>} : memref<250x256xf32, #tpu.memory_space<vmem>>, vector<10x191xf32>,
    %55 = vector.extract_strided_slice %46 {offsets = [0, 0], sizes = [10, 192], strides = [1, 1]} : vector<10x256xf32> to vector<10x192xf32>
    %c40 = arith.constant 40 : index
    %c64 = arith.constant 64 : index
    %56 = vector.load %arg9[%c40, %c64] : memref<250x256xf32, #tpu.memory_space<vmem>>, vector<10x192xf32>
    tpu.vector_store %arg9[%c40, %c64], %55 {strides = array<i32>} : memref<250x256xf32, #tpu.memory_space<vmem>>, vector<10x192xf32>,
    %57 = vector.extract_strided_slice %30 {offsets = [0, 0], sizes = [10, 204], strides = [1, 1]} : vector<10x256xf32> to vector<10x204xf32>
    %c50 = arith.constant 50 : index
    %c52 = arith.constant 52 : index
    %58 = vector.load %arg9[%c50, %c52] : memref<250x256xf32, #tpu.memory_space<vmem>>, vector<10x204xf32>
    tpu.vector_store %arg9[%c50, %c52], %57 {strides = array<i32>} : memref<250x256xf32, #tpu.memory_space<vmem>>, vector<10x204xf32>,
    %59 = vector.extract_strided_slice %34 {offsets = [0, 0], sizes = [10, 205], strides = [1, 1]} : vector<10x256xf32> to vector<10x205xf32>
    %c60 = arith.constant 60 : index
    %c51 = arith.constant 51 : index
    %60 = vector.load %arg9[%c60, %c51] : memref<250x256xf32, #tpu.memory_space<vmem>>, vector<10x205xf32>
    tpu.vector_store %arg9[%c60, %c51], %59 {strides = array<i32>} : memref<250x256xf32, #tpu.memory_space<vmem>>, vector<10x205xf32>,
    %61 = vector.extract_strided_slice %38 {offsets = [0, 0], sizes = [10, 206], strides = [1, 1]} : vector<10x256xf32> to vector<10x206xf32>
    %c70 = arith.constant 70 : index
    %c50_20 = arith.constant 50 : index
    %62 = vector.load %arg9[%c70, %c50_20] : memref<250x256xf32, #tpu.memory_space<vmem>>, vector<10x206xf32>
    tpu.vector_store %arg9[%c70, %c50_20], %61 {strides = array<i32>} : memref<250x256xf32, #tpu.memory_space<vmem>>, vector<10x206xf32>,
    %63 = vector.extract_strided_slice %42 {offsets = [0, 0], sizes = [10, 207], strides = [1, 1]} : vector<10x256xf32> to vector<10x207xf32>
    %c80 = arith.constant 80 : index
    %c49 = arith.constant 49 : index
    %64 = vector.load %arg9[%c80, %c49] : memref<250x256xf32, #tpu.memory_space<vmem>>, vector<10x207xf32>
    tpu.vector_store %arg9[%c80, %c49], %63 {strides = array<i32>} : memref<250x256xf32, #tpu.memory_space<vmem>>, vector<10x207xf32>,
    %65 = vector.extract_strided_slice %46 {offsets = [0, 0], sizes = [10, 208], strides = [1, 1]} : vector<10x256xf32> to vector<10x208xf32>
    %c90 = arith.constant 90 : index
    %c48 = arith.constant 48 : index
    %66 = vector.load %arg9[%c90, %c48] : memref<250x256xf32, #tpu.memory_space<vmem>>, vector<10x208xf32>
    tpu.vector_store %arg9[%c90, %c48], %65 {strides = array<i32>} : memref<250x256xf32, #tpu.memory_space<vmem>>, vector<10x208xf32>,
    %67 = vector.extract_strided_slice %30 {offsets = [0, 0], sizes = [10, 220], strides = [1, 1]} : vector<10x256xf32> to vector<10x220xf32>
    %c100 = arith.constant 100 : index
    %c36 = arith.constant 36 : index
    %68 = vector.load %arg9[%c100, %c36] : memref<250x256xf32, #tpu.memory_space<vmem>>, vector<10x220xf32>
    tpu.vector_store %arg9[%c100, %c36], %67 {strides = array<i32>} : memref<250x256xf32, #tpu.memory_space<vmem>>, vector<10x220xf32>,
    %69 = vector.extract_strided_slice %34 {offsets = [0, 0], sizes = [10, 221], strides = [1, 1]} : vector<10x256xf32> to vector<10x221xf32>
    %c110 = arith.constant 110 : index
    %c35 = arith.constant 35 : index
    %70 = vector.load %arg9[%c110, %c35] : memref<250x256xf32, #tpu.memory_space<vmem>>, vector<10x221xf32>
    tpu.vector_store %arg9[%c110, %c35], %69 {strides = array<i32>} : memref<250x256xf32, #tpu.memory_space<vmem>>, vector<10x221xf32>,
    %71 = vector.extract_strided_slice %38 {offsets = [0, 0], sizes = [10, 222], strides = [1, 1]} : vector<10x256xf32> to vector<10x222xf32>
    %c120 = arith.constant 120 : index
    %c34 = arith.constant 34 : index
    %72 = vector.load %arg9[%c120, %c34] : memref<250x256xf32, #tpu.memory_space<vmem>>, vector<10x222xf32>
    tpu.vector_store %arg9[%c120, %c34], %71 {strides = array<i32>} : memref<250x256xf32, #tpu.memory_space<vmem>>, vector<10x222xf32>,
    %73 = vector.extract_strided_slice %42 {offsets = [0, 0], sizes = [10, 223], strides = [1, 1]} : vector<10x256xf32> to vector<10x223xf32>
    %c130 = arith.constant 130 : index
    %c33 = arith.constant 33 : index
    %74 = vector.load %arg9[%c130, %c33] : memref<250x256xf32, #tpu.memory_space<vmem>>, vector<10x223xf32>
    tpu.vector_store %arg9[%c130, %c33], %73 {strides = array<i32>} : memref<250x256xf32, #tpu.memory_space<vmem>>, vector<10x223xf32>,
    %75 = vector.extract_strided_slice %46 {offsets = [0, 0], sizes = [10, 224], strides = [1, 1]} : vector<10x256xf32> to vector<10x224xf32>
    %c140 = arith.constant 140 : index
    %c32 = arith.constant 32 : index
    %76 = vector.load %arg9[%c140, %c32] : memref<250x256xf32, #tpu.memory_space<vmem>>, vector<10x224xf32>
    tpu.vector_store %arg9[%c140, %c32], %75 {strides = array<i32>} : memref<250x256xf32, #tpu.memory_space<vmem>>, vector<10x224xf32>,
    %77 = vector.extract_strided_slice %30 {offsets = [0, 0], sizes = [10, 236], strides = [1, 1]} : vector<10x256xf32> to vector<10x236xf32>
    %c150 = arith.constant 150 : index
    %c20_21 = arith.constant 20 : index
    %78 = vector.load %arg9[%c150, %c20_21] : memref<250x256xf32, #tpu.memory_space<vmem>>, vector<10x236xf32>
    tpu.vector_store %arg9[%c150, %c20_21], %77 {strides = array<i32>} : memref<250x256xf32, #tpu.memory_space<vmem>>, vector<10x236xf32>,
    %79 = vector.extract_strided_slice %34 {offsets = [0, 0], sizes = [10, 237], strides = [1, 1]} : vector<10x256xf32> to vector<10x237xf32>
    %c160 = arith.constant 160 : index
    %c19 = arith.constant 19 : index
    %80 = vector.load %arg9[%c160, %c19] : memref<250x256xf32, #tpu.memory_space<vmem>>, vector<10x237xf32>
    tpu.vector_store %arg9[%c160, %c19], %79 {strides = array<i32>} : memref<250x256xf32, #tpu.memory_space<vmem>>, vector<10x237xf32>,
    %81 = vector.extract_strided_slice %38 {offsets = [0, 0], sizes = [10, 238], strides = [1, 1]} : vector<10x256xf32> to vector<10x238xf32>
    %c170 = arith.constant 170 : index
    %c18 = arith.constant 18 : index
    %82 = vector.load %arg9[%c170, %c18] : memref<250x256xf32, #tpu.memory_space<vmem>>, vector<10x238xf32>
    tpu.vector_store %arg9[%c170, %c18], %81 {strides = array<i32>} : memref<250x256xf32, #tpu.memory_space<vmem>>, vector<10x238xf32>,
    %83 = vector.extract_strided_slice %42 {offsets = [0, 0], sizes = [10, 239], strides = [1, 1]} : vector<10x256xf32> to vector<10x239xf32>
    %c180 = arith.constant 180 : index
    %c17 = arith.constant 17 : index
    %84 = vector.load %arg9[%c180, %c17] : memref<250x256xf32, #tpu.memory_space<vmem>>, vector<10x239xf32>
    tpu.vector_store %arg9[%c180, %c17], %83 {strides = array<i32>} : memref<250x256xf32, #tpu.memory_space<vmem>>, vector<10x239xf32>,
    %85 = vector.extract_strided_slice %46 {offsets = [0, 0], sizes = [10, 240], strides = [1, 1]} : vector<10x256xf32> to vector<10x240xf32>
    %c190 = arith.constant 190 : index
    %c16 = arith.constant 16 : index
    %86 = vector.load %arg9[%c190, %c16] : memref<250x256xf32, #tpu.memory_space<vmem>>, vector<10x240xf32>
    tpu.vector_store %arg9[%c190, %c16], %85 {strides = array<i32>} : memref<250x256xf32, #tpu.memory_space<vmem>>, vector<10x240xf32>,
    %87 = vector.extract_strided_slice %30 {offsets = [0, 0], sizes = [10, 252], strides = [1, 1]} : vector<10x256xf32> to vector<10x252xf32>
    %c200 = arith.constant 200 : index
    %c4 = arith.constant 4 : index
    %88 = vector.load %arg9[%c200, %c4] : memref<250x256xf32, #tpu.memory_space<vmem>>, vector<10x252xf32>
    tpu.vector_store %arg9[%c200, %c4], %87 {strides = array<i32>} : memref<250x256xf32, #tpu.memory_space<vmem>>, vector<10x252xf32>,
    %89 = vector.extract_strided_slice %34 {offsets = [0, 0], sizes = [10, 253], strides = [1, 1]} : vector<10x256xf32> to vector<10x253xf32>
    %c210 = arith.constant 210 : index
    %c3 = arith.constant 3 : index
    %90 = vector.load %arg9[%c210, %c3] : memref<250x256xf32, #tpu.memory_space<vmem>>, vector<10x253xf32>
    tpu.vector_store %arg9[%c210, %c3], %89 {strides = array<i32>} : memref<250x256xf32, #tpu.memory_space<vmem>>, vector<10x253xf32>,
    %91 = vector.extract_strided_slice %38 {offsets = [0, 0], sizes = [10, 254], strides = [1, 1]} : vector<10x256xf32> to vector<10x254xf32>
    %c220 = arith.constant 220 : index
    %c2 = arith.constant 2 : index
    %92 = vector.load %arg9[%c220, %c2] : memref<250x256xf32, #tpu.memory_space<vmem>>, vector<10x254xf32>
    tpu.vector_store %arg9[%c220, %c2], %91 {strides = array<i32>} : memref<250x256xf32, #tpu.memory_space<vmem>>, vector<10x254xf32>,
    %93 = vector.extract_strided_slice %42 {offsets = [0, 0], sizes = [10, 255], strides = [1, 1]} : vector<10x256xf32> to vector<10x255xf32>
    %c230 = arith.constant 230 : index
    %c1 = arith.constant 1 : index
    %94 = vector.load %arg9[%c230, %c1] : memref<250x256xf32, #tpu.memory_space<vmem>>, vector<10x255xf32>
    tpu.vector_store %arg9[%c230, %c1], %93 {strides = array<i32>} : memref<250x256xf32, #tpu.memory_space<vmem>>, vector<10x255xf32>,
    %c240 = arith.constant 240 : index
    %c0_22 = arith.constant 0 : index
    %95 = vector.load %arg9[%c240, %c0_22] : memref<250x256xf32, #tpu.memory_space<vmem>>, vector<10x256xf32>
    tpu.vector_store %arg9[%c240, %c0_22], %46 {strides = array<i32>} : memref<250x256xf32, #tpu.memory_space<vmem>>, vector<10x256xf32>,
    %c0_23 = arith.constant 0 : index
    %c0_24 = arith.constant 0 : index
    %96 = vector.load %arg5[%c0_23, %c0_24] : memref<20x250xf32, #tpu.memory_space<vmem>>, vector<20x250xf32>
    %c0_25 = arith.constant 0 : index
    %c0_26 = arith.constant 0 : index
    %97 = vector.load %arg9[%c0_25, %c0_26] : memref<250x256xf32, #tpu.memory_space<vmem>>, vector<250x256xf32>
    %cst_27 = arith.constant dense<0.000000e+00> : vector<20x256xf32>
    %98 = tpu.matmul %96, %97, %cst_27 {dimension_numbers = #tpu.dot_dimension_numbers<[1], [0], [0], [1], [0, 0, 1, 1], [], []>} : vector<20x250xf32>, vector<250x256xf32>, vector<20x256xf32> -> vector<20x256xf32>
    %c0_28 = arith.constant 0 : index
    %c0_29 = arith.constant 0 : index
    %99 = vector.load %arg6[%c0_28, %c0_29] : memref<20x256xf32, #tpu.memory_space<vmem>>, vector<20x256xf32>
    %100 = arith.addf %98, %99 : vector<20x256xf32>
    %101 = vector.extract_strided_slice %100 {offsets = [0, 0], sizes = [10, 256], strides = [1, 1]} : vector<20x256xf32> to vector<10x256xf32>
    %102 = vector.extract_strided_slice %100 {offsets = [10, 0], sizes = [10, 256], strides = [1, 1]} : vector<20x256xf32> to vector<10x256xf32>
    %cst_30 = arith.constant 2.000000e+01 : f32
    %103 = vector.broadcast %cst_30 : f32 to vector<10x256xf32>
    %104 = arith.cmpf ogt, %102, %103 : vector<10x256xf32>
    %cst_31 = arith.constant 2.000000e+01 : f32
    %105 = vector.broadcast %cst_31 : f32 to vector<10x256xf32>
    %106 = arith.minimumf %102, %105 : vector<10x256xf32>
    %107 = math.exp %106 : vector<10x256xf32>
    %cst_32 = arith.constant 1.000000e+00 : f32
    %108 = vector.broadcast %cst_32 : f32 to vector<10x256xf32>
    %109 = arith.addf %108, %107 : vector<10x256xf32>
    %110 = math.log %109 : vector<10x256xf32>
    %111 = arith.select %104, %102, %110 : vector<10x256xi1>, vector<10x256xf32>
    %c0_33 = arith.constant 0 : index
    %c0_34 = arith.constant 0 : index
    %c0_35 = arith.constant 0 : index
    %112 = vector.load %arg2[%c0_33, %c0_34, %c0_35] : memref<1x10x256xf32, #tpu.memory_space<vmem>>, vector<1x10x256xf32>
    %113 = vector.shape_cast %112 : vector<1x10x256xf32> to vector<10x256xf32>
    %114 = arith.mulf %111, %113 : vector<10x256xf32>
    %115 = arith.addf %101, %114 : vector<10x256xf32>
    %c0_36 = arith.constant 0 : index
    %c0_37 = arith.constant 0 : index
    %c0_38 = arith.constant 0 : index
    %116 = vector.load %arg7[%c0_36, %c0_37, %c0_38] : memref<1x10x256xf32, #tpu.memory_space<vmem>>, vector<1x10x256xf32>
    %117 = vector.shape_cast %116 : vector<1x10x256xf32> to vector<10x256xf32>
    %118 = vector.shape_cast %115 : vector<10x256xf32> to vector<1x10x256xf32>
    tpu.vector_store %arg7[%c0_36, %c0_37, %c0_38], %118 {strides = array<i32>} : memref<1x10x256xf32, #tpu.memory_space<vmem>>, vector<1x10x256xf32>,
    %119 = arith.mulf %113, %113 : vector<10x256xf32>
    %cst_39 = arith.constant -5.000000e-01 : f32
    %120 = vector.broadcast %cst_39 : f32 to vector<10x256xf32>
    %121 = arith.mulf %120, %119 : vector<10x256xf32>
    %122 = math.log %111 : vector<10x256xf32>
    %123 = arith.subf %121, %122 : vector<10x256xf32>
    %cst_40 = arith.constant 0.918938517 : f32
    %124 = vector.broadcast %cst_40 : f32 to vector<10x256xf32>
    %125 = arith.subf %123, %124 : vector<10x256xf32>
    %126 = vector.shape_cast %125 : vector<10x256xf32> to vector<1x10x256xf32>
    %cst_41 = arith.constant dense<0.000000e+00> : vector<1xf32>
    %127 = vector.multi_reduction <add>, %126, %cst_41 [1, 2] : vector<1x10x256xf32> to vector<1xf32>
    %128 = vector.shape_cast %127 : vector<1xf32> to vector<1x1x1xf32>
    %129 = vector.extract %128[0, 0, 0] : f32 from vector<1x1x1xf32>
    %130 = vector.broadcast %129 : f32 to vector<1x1x128xf32>
    %c0_42 = arith.constant 0 : index
    %c0_43 = arith.constant 0 : index
    %c0_44 = arith.constant 0 : index
    %131 = vector.load %arg8[%c0_42, %c0_43, %c0_44] : memref<1x1x128xf32, #tpu.memory_space<vmem>>, vector<1x1x128xf32>
    tpu.vector_store %arg8[%c0_42, %c0_43, %c0_44], %130 {strides = array<i32>} : memref<1x1x128xf32, #tpu.memory_space<vmem>>, vector<1x1x128xf32>,
    return
  }
  func.func @transform_0(%arg0: i32) -> (i32, i32, i32) {
    %c0_i32 = arith.constant 0 : i32
    %c0_i32_0 = arith.constant 0 : i32
    %c0_i32_1 = arith.constant 0 : i32
    return %arg0, %c0_i32, %c0_i32_0 : i32, i32, i32
  }
  func.func @transform_1(%arg0: i32) -> (i32, i32, i32) {
    %c0_i32 = arith.constant 0 : i32
    %c0_i32_0 = arith.constant 0 : i32
    %c0_i32_1 = arith.constant 0 : i32
    return %arg0, %c0_i32, %c0_i32_0 : i32, i32, i32
  }
  func.func @transform_2(%arg0: i32) -> (i32, i32) {
    %c0_i32 = arith.constant 0 : i32
    %c0_i32_0 = arith.constant 0 : i32
    %c0_i32_1 = arith.constant 0 : i32
    return %c0_i32, %c0_i32_0 : i32, i32
  }
  func.func @transform_3(%arg0: i32) -> (i32, i32) {
    %c0_i32 = arith.constant 0 : i32
    %c0_i32_0 = arith.constant 0 : i32
    %c0_i32_1 = arith.constant 0 : i32
    return %c0_i32, %c0_i32_0 : i32, i32
  }
  func.func @transform_4(%arg0: i32) -> (i32, i32) {
    %c0_i32 = arith.constant 0 : i32
    %c0_i32_0 = arith.constant 0 : i32
    %c0_i32_1 = arith.constant 0 : i32
    return %c0_i32, %c0_i32_0 : i32, i32
  }
  func.func @transform_5(%arg0: i32) -> (i32, i32) {
    %c0_i32 = arith.constant 0 : i32
    %c0_i32_0 = arith.constant 0 : i32
    %c0_i32_1 = arith.constant 0 : i32
    return %c0_i32, %c0_i32_0 : i32, i32
  }
  func.func @transform_6(%arg0: i32) -> (i32, i32, i32) {
    %c0_i32 = arith.constant 0 : i32
    %c0_i32_0 = arith.constant 0 : i32
    %c0_i32_1 = arith.constant 0 : i32
    return %arg0, %c0_i32, %c0_i32_0 : i32, i32, i32
  }
  func.func @transform_7(%arg0: i32) -> (i32, i32, i32) {
    %c0_i32 = arith.constant 0 : i32
    %c0_i32_0 = arith.constant 0 : i32
    %c0_i32_1 = arith.constant 0 : i32
    return %arg0, %c0_i32, %c0_i32_0 : i32, i32, i32
  }
}

</mosaic_0001>

<llo_original>
// kernel: tpu_custom_call.1
$region0: #{tpu_custom_call.1}
  #allocation0 [shape = 'u32[]', space=smem, size = 0x4, offset = 0x4, fixed_abs, tag = 'smem constant byte address 0x4 - core index']
  #allocation1 [shape = 'u32[144,128]{1,0:T(1,128)}', space=vmem, size = 0x12000, scoped, tag = 'internal scratch']
  #allocation2 [shape = 'f32[250,256]{1,0:T(8,128)}', space=vmem, size = 0x40000, scoped, tag = 'scratch operand']
  %s0 = inlined_call_operand.vmem [shape: f32[2,25,256], index: 0, kind: input, shape index: {}]
  %s1 = inlined_call_operand.vmem [shape: f32[2,10,256], index: 1, kind: input, shape index: {}]
  %s2 = inlined_call_operand.vmem [shape: f32[10,25], index: 2, kind: input, shape index: {}]
  %s3 = inlined_call_operand.vmem [shape: f32[10,256], index: 3, kind: input, shape index: {}]
  %s4 = inlined_call_operand.vmem [shape: f32[20,250], index: 4, kind: input, shape index: {}]
  %s5 = inlined_call_operand.vmem [shape: f32[20,256], index: 5, kind: input, shape index: {}]
  %s6 = inlined_call_operand.vmem [shape: f32[2,10,256], index: 6, kind: output, shape index: {0}]
  %s7 = inlined_call_operand.hbm [shape: f32[2,1,128], index: 7, kind: output, shape index: {1}]
  %8 = xla_tuple %s6, %s7
  %s9 = sld [smem:[#allocation0]]
  $region65: #{tpu_custom_call.1} parent=0
    _
  %s11 = ssub.s32 1, %s9
  %s12 = scalar_select 0, %s11, %s9
  $region1: #{tpu_custom_call.1} parent=0
    #allocation3 [shape = 'u8[1024]{0}', space=vmem, size = 0x400, scoped, tag = 'output window, operand 1']
    #allocation4 [shape = 's32[2]{0}', space=sflag, size = 0x8, scoped, tag = 'scoped memory for tpu_custom_call.1']
    %13 = vsyncpa [#allocation4], 0
    %s14 = scalar_lea.sflag [#allocation4], 1
    %15 = vsyncpa %s14, 0
    loop: start=0, step=1, limit=4
    $region2: #{tpu_custom_call.1} parent=1 // loop_pre_header
      _
    $region3: #{tpu_custom_call.1} parent=1 // loop_header
      %s17 = sphi 0, %s21
      %p18 = scmp.ge.s32.totalorder %s17, 4
      %s27 = sphi 0, %s29
      %s30 = sphi 0, %s27
      %s31 = sphi 0, %s30
      %s47 = sphi 0, %s31
      %s53 = sphi 0, %s55
      %s56 = sphi 0, %s53
      %s57 = sphi 0, %s56
      %s73 = sphi 0, %s57
      %s77 = sphi 0, %s77
      %s79 = sphi 0, %s77
      %s80 = sphi 0, %s79
      %s94 = sphi 0, %s80
      %s98 = sphi 0, %s98
      %s100 = sphi 0, %s98
      %s101 = sphi 0, %s100
      %s115 = sphi 0, %s101
      %s119 = sphi 0, %s119
      %s121 = sphi 0, %s119
      %s122 = sphi 0, %s121
      %s136 = sphi 0, %s122
      %s140 = sphi 0, %s140
      %s142 = sphi 0, %s140
      %s143 = sphi 0, %s142
      %s157 = sphi 0, %s143
      %s163 = sphi 0, %s165
      %s166 = sphi 0, %s163
      %s167 = sphi 0, %s166
      %s183 = sphi 0, %s167
      %s189 = sphi 0, %s191
      %s192 = sphi 0, %s189
      %s193 = sphi 0, %s192
      %s209 = sphi 0, %s193
    $region4: #{tpu_custom_call.1} parent=1 // loop_header_branch
      %20 = sbr.rel (%p18) target = $region8
    $region5: #{tpu_custom_call.1} parent=1 // loop_body
      %s22 = ssub.s32 %s17, 1
      %s23 = ssub.s32 %s17, 2
      %s24 = sadd.s32 %s17, 1
      %s25 = ssub.s32 %s17, %s24
      %p26 = scmp.eq.s32.totalorder %s25, 0
      %s28 = sadd.s32 %s27, 1
      %s29 = scalar_select %p26, %s27, %s28
      %p32 = pneg %p26
      %p33 = scmp.eq.s32.totalorder %s17, 1
      %p34 = por %p32, %p33
      %p35 = scmp.ne.s32.totalorder %s27, %s30
      %p36 = scmp.eq.s32.totalorder %s17, 0
      %p37 = por %p35, %p36
      %p38 = scmp.ne.s32.totalorder %s27, %s30
      %p39 = scmp.eq.s32.totalorder %s22, 1
      %p40 = por %p38, %p39
      %p41 = scmp.ne.s32.totalorder %s30, %s31
      %p42 = scmp.eq.s32.totalorder %s22, 0
      %p43 = por %p41, %p42
      %p44 = scmp.ne.s32.totalorder %s30, %s31
      %p45 = scmp.eq.s32.totalorder %s23, 1
      %p46 = por %p44, %p45
      %p48 = scmp.ne.s32.totalorder %s31, %s47
      %p49 = scmp.eq.s32.totalorder %s23, 0
      %p50 = por %p48, %p49
      %s51 = ssub.s32 %s17, %s24
      %p52 = scmp.eq.s32.totalorder %s51, 0
      %s54 = sadd.s32 %s53, 1
      %s55 = scalar_select %p52, %s53, %s54
      %p58 = pneg %p52
      %p59 = scmp.eq.s32.totalorder %s17, 1
      %p60 = por %p58, %p59
      %p61 = scmp.ne.s32.totalorder %s53, %s56
      %p62 = scmp.eq.s32.totalorder %s17, 0
      %p63 = por %p61, %p62
      %p64 = scmp.ne.s32.totalorder %s53, %s56
      %p65 = scmp.eq.s32.totalorder %s22, 1
      %p66 = por %p64, %p65
      %p67 = scmp.ne.s32.totalorder %s56, %s57
      %p68 = scmp.eq.s32.totalorder %s22, 0
      %p69 = por %p67, %p68
      %p70 = scmp.ne.s32.totalorder %s56, %s57
      %p71 = scmp.eq.s32.totalorder %s23, 1
      %p72 = por %p70, %p71
      %p74 = scmp.ne.s32.totalorder %s57, %s73
      %p75 = scmp.eq.s32.totalorder %s23, 0
      %p76 = por %p74, %p75
      %s78 = sadd.s32 %s77, 1
      %p81 = scmp.eq.s32.totalorder %s17, 1
      %p82 = scmp.ne.s32.totalorder %s77, %s79
      %p83 = scmp.eq.s32.totalorder %s17, 0
      %p84 = por %p82, %p83
      %p85 = scmp.ne.s32.totalorder %s77, %s79
      %p86 = scmp.eq.s32.totalorder %s22, 1
      %p87 = por %p85, %p86
      %p88 = scmp.ne.s32.totalorder %s79, %s80
      %p89 = scmp.eq.s32.totalorder %s22, 0
      %p90 = por %p88, %p89
      %p91 = scmp.ne.s32.totalorder %s79, %s80
      %p92 = scmp.eq.s32.totalorder %s23, 1
      %p93 = por %p91, %p92
      %p95 = scmp.ne.s32.totalorder %s80, %s94
      %p96 = scmp.eq.s32.totalorder %s23, 0
      %p97 = por %p95, %p96
      %s99 = sadd.s32 %s98, 1
      %p102 = scmp.eq.s32.totalorder %s17, 1
      %p103 = scmp.ne.s32.totalorder %s98, %s100
      %p104 = scmp.eq.s32.totalorder %s17, 0
      %p105 = por %p103, %p104
      %p106 = scmp.ne.s32.totalorder %s98, %s100
      %p107 = scmp.eq.s32.totalorder %s22, 1
      %p108 = por %p106, %p107
      %p109 = scmp.ne.s32.totalorder %s100, %s101
      %p110 = scmp.eq.s32.totalorder %s22, 0
      %p111 = por %p109, %p110
      %p112 = scmp.ne.s32.totalorder %s100, %s101
      %p113 = scmp.eq.s32.totalorder %s23, 1
      %p114 = por %p112, %p113
      %p116 = scmp.ne.s32.totalorder %s101, %s115
      %p117 = scmp.eq.s32.totalorder %s23, 0
      %p118 = por %p116, %p117
      %s120 = sadd.s32 %s119, 1
      %p123 = scmp.eq.s32.totalorder %s17, 1
      %p124 = scmp.ne.s32.totalorder %s119, %s121
      %p125 = scmp.eq.s32.totalorder %s17, 0
      %p126 = por %p124, %p125
      %p127 = scmp.ne.s32.totalorder %s119, %s121
      %p128 = scmp.eq.s32.totalorder %s22, 1
      %p129 = por %p127, %p128
      %p130 = scmp.ne.s32.totalorder %s121, %s122
      %p131 = scmp.eq.s32.totalorder %s22, 0
      %p132 = por %p130, %p131
      %p133 = scmp.ne.s32.totalorder %s121, %s122
      %p134 = scmp.eq.s32.totalorder %s23, 1
      %p135 = por %p133, %p134
      %p137 = scmp.ne.s32.totalorder %s122, %s136
      %p138 = scmp.eq.s32.totalorder %s23, 0
      %p139 = por %p137, %p138
      %s141 = sadd.s32 %s140, 1
      %p144 = scmp.eq.s32.totalorder %s17, 1
      %p145 = scmp.ne.s32.totalorder %s140, %s142
      %p146 = scmp.eq.s32.totalorder %s17, 0
      %p147 = por %p145, %p146
      %p148 = scmp.ne.s32.totalorder %s140, %s142
      %p149 = scmp.eq.s32.totalorder %s22, 1
      %p150 = por %p148, %p149
      %p151 = scmp.ne.s32.totalorder %s142, %s143
      %p152 = scmp.eq.s32.totalorder %s22, 0
      %p153 = por %p151, %p152
      %p154 = scmp.ne.s32.totalorder %s142, %s143
      %p155 = scmp.eq.s32.totalorder %s23, 1
      %p156 = por %p154, %p155
      %p158 = scmp.ne.s32.totalorder %s143, %s157
      %p159 = scmp.eq.s32.totalorder %s23, 0
      %p160 = por %p158, %p159
      %s161 = ssub.s32 %s17, %s24
      %p162 = scmp.eq.s32.totalorder %s161, 0
      %s164 = sadd.s32 %s163, 1
      %s165 = scalar_select %p162, %s163, %s164
      %p168 = pneg %p162
      %p169 = scmp.eq.s32.totalorder %s17, 1
      %p170 = por %p168, %p169
      %p171 = scmp.ne.s32.totalorder %s163, %s166
      %p172 = scmp.eq.s32.totalorder %s17, 0
      %p173 = por %p171, %p172
      %p174 = scmp.ne.s32.totalorder %s163, %s166
      %p175 = scmp.eq.s32.totalorder %s22, 1
      %p176 = por %p174, %p175
      %p177 = scmp.ne.s32.totalorder %s166, %s167
      %p178 = scmp.eq.s32.totalorder %s22, 0
      %p179 = por %p177, %p178
      %p180 = scmp.ne.s32.totalorder %s166, %s167
      %p181 = scmp.eq.s32.totalorder %s23, 1
      %p182 = por %p180, %p181
      %p184 = scmp.ne.s32.totalorder %s167, %s183
      %p185 = scmp.eq.s32.totalorder %s23, 0
      %p186 = por %p184, %p185
      %s187 = ssub.s32 %s17, %s24
      %p188 = scmp.eq.s32.totalorder %s187, 0
      %s190 = sadd.s32 %s189, 1
      %s191 = scalar_select %p188, %s189, %s190
      %p194 = pneg %p188
      %p195 = scmp.eq.s32.totalorder %s17, 1
      %p196 = por %p194, %p195
      %p197 = scmp.ne.s32.totalorder %s189, %s192
      %p198 = scmp.eq.s32.totalorder %s17, 0
      %p199 = por %p197, %p198
      %p200 = scmp.ne.s32.totalorder %s189, %s192
      %p201 = scmp.eq.s32.totalorder %s22, 1
      %p202 = por %p200, %p201
      %p203 = scmp.ne.s32.totalorder %s192, %s193
      %p204 = scmp.eq.s32.totalorder %s22, 0
      %p205 = por %p203, %p204
      %p206 = scmp.ne.s32.totalorder %s192, %s193
      %p207 = scmp.eq.s32.totalorder %s23, 1
      %p208 = por %p206, %p207
      %p210 = scmp.ne.s32.totalorder %s193, %s209
      %p211 = scmp.eq.s32.totalorder %s23, 0
      %p212 = por %p210, %p211
      %p213 = scmp.le.s32.totalorder 1, %s17
      %p214 = scmp.lt.s32.totalorder %s17, 3
      %p215 = pnand %p213, %p214
      %p216 = pneg %p215
      // Predicated region
      $region9: #{tpu_custom_call.1} parent=5 // pred_check
        _
      $region10: #{tpu_custom_call.1} parent=5 // pred_check_branch
        %218 = sbr.rel (%p215) target = $region12
      $region11: #{tpu_custom_call.1} parent=5 // pred_region
        %s219 = ssub.s32 %s17, 1
        // Predicated region
        $region13: #{tpu_custom_call.1} parent=11 // pred_check
          %p220 = pneg %p90
        $region14: #{tpu_custom_call.1} parent=11 // pred_check_branch
          %222 = sbr.rel (%p220) target = $region16
        $region15: #{tpu_custom_call.1} parent=11 // pred_region
          _
        $region16: #{tpu_custom_call.1} parent=11 // pred_fallthru
          _
        // Predicated region
        $region17: #{tpu_custom_call.1} parent=11 // pred_check
          %p223 = pneg %p111
        $region18: #{tpu_custom_call.1} parent=11 // pred_check_branch
          %225 = sbr.rel (%p223) target = $region20
        $region19: #{tpu_custom_call.1} parent=11 // pred_region
          _
        $region20: #{tpu_custom_call.1} parent=11 // pred_fallthru
          _
        // Predicated region
        $region21: #{tpu_custom_call.1} parent=11 // pred_check
          %p226 = pneg %p132
        $region22: #{tpu_custom_call.1} parent=11 // pred_check_branch
          %228 = sbr.rel (%p226) target = $region24
        $region23: #{tpu_custom_call.1} parent=11 // pred_region
          _
        $region24: #{tpu_custom_call.1} parent=11 // pred_fallthru
          _
        // Predicated region
        $region25: #{tpu_custom_call.1} parent=11 // pred_check
          %p229 = pneg %p153
        $region26: #{tpu_custom_call.1} parent=11 // pred_check_branch
          %231 = sbr.rel (%p229) target = $region28
        $region27: #{tpu_custom_call.1} parent=11 // pred_region
          _
        $region28: #{tpu_custom_call.1} parent=11 // pred_fallthru
          _
      $region12: #{tpu_custom_call.1} parent=5 // pred_fallthru
        _
      %p232 = scmp.lt.s32.totalorder %s17, 2
      // Predicated region
      $region29: #{tpu_custom_call.1} parent=5 // pred_check
        %p233 = pneg %p232
      $region30: #{tpu_custom_call.1} parent=5 // pred_check_branch
        %235 = sbr.rel (%p233) target = $region32
      $region31: #{tpu_custom_call.1} parent=5 // pred_region
        // Predicated region
        $region33: #{tpu_custom_call.1} parent=31 // pred_check
          %p236 = pneg %p37
        $region34: #{tpu_custom_call.1} parent=31 // pred_check_branch
          %238 = sbr.rel (%p236) target = $region36
        $region35: #{tpu_custom_call.1} parent=31 // pred_region
          %p239 = scmp.lt.s32.totalorder %s17, 1
          %s240 = scalar_select %p239, %s17, 1
          %s241 = smul.addr %s240, 8
          %s242 = smul.addr %s241, 8
          %s243 = scalar_lea.vmem %s0, %s242
        $region36: #{tpu_custom_call.1} parent=31 // pred_fallthru
          _
        // Predicated region
        $region37: #{tpu_custom_call.1} parent=31 // pred_check
          %p244 = pneg %p63
        $region38: #{tpu_custom_call.1} parent=31 // pred_check_branch
          %246 = sbr.rel (%p244) target = $region40
        $region39: #{tpu_custom_call.1} parent=31 // pred_region
          %p247 = scmp.lt.s32.totalorder %s17, 1
          %s248 = scalar_select %p247, %s17, 1
          %s249 = smul.addr %s248, 4
          %s250 = smul.addr %s249, 8
          %s251 = scalar_lea.vmem %s1, %s250
        $region40: #{tpu_custom_call.1} parent=31 // pred_fallthru
          _
      $region32: #{tpu_custom_call.1} parent=5 // pred_fallthru
        _
      %p252 = scmp.le.s32.totalorder 1, %s17
      %p253 = scmp.lt.s32.totalorder %s17, 3
      %p254 = pnand %p252, %p253
      %p255 = pneg %p254
      // Predicated region
      $region41: #{tpu_custom_call.1} parent=5 // pred_check
        _
      $region42: #{tpu_custom_call.1} parent=5 // pred_check_branch
        %257 = sbr.rel (%p254) target = $region44
      $region43: #{tpu_custom_call.1} parent=5 // pred_region
        %s258 = ssub.s32 %s17, 1
        %p259 = scmp.lt.s32.totalorder %s22, 1
        %s260 = scalar_select %p259, %s22, 1
        %s261 = smul.addr %s260, 8
        %s262 = smul.addr %s261, 8
        %s263 = scalar_lea.vmem %s0, %s262
        %p264 = pneg %p43
        %p265 = pneg %p40
        %p266 = scmp.lt.s32.totalorder %s22, 1
        %s267 = scalar_select %p266, %s22, 1
        %s268 = smul.addr %s267, 4
        %s269 = smul.addr %s268, 8
        %s270 = scalar_lea.vmem %s1, %s269
        %p271 = pneg %p69
        %p272 = pneg %p66
        %p273 = pneg %p90
        %p274 = pneg %p87
        %p275 = pneg %p111
        %p276 = pneg %p108
        %p277 = pneg %p132
        %p278 = pneg %p129
        %p279 = pneg %p153
        %p280 = pneg %p150
        %p281 = pneg %p179
        %p282 = pneg %p176
        %p283 = scmp.lt.s32.totalorder %s22, 1
        %s284 = scalar_select %p283, %s22, 1
        %s285 = smul.addr %s284, 4
        %s286 = smul.addr %s285, 8
        %s287 = scalar_lea.vmem %s6, %s286
        %p288 = pneg %p205
        %p289 = pneg %p202
        %s290 = sand.u32 %s192, 1
        %s291 = scalar_lea.sflag [#allocation4], %s290
        %s292 = sand.u32 %s192, 1
        %s293 = scalar_lea.vmem [#allocation3], %s292
        %p294 = scmp.lt.s32.totalorder %s22, 1
        %s295 = scalar_select %p294, %s22, 1
        %s296 = smul.addr %s295, 8
        %s297 = smul.addr %s296, 8
        %s298 = scalar_lea.vmem %s0, %s297
        %p299 = scmp.lt.s32.totalorder %s22, 1
        %s300 = scalar_select %p299, %s22, 1
        %s301 = smul.addr %s300, 4
        %s302 = smul.addr %s301, 8
        %s303 = scalar_lea.vmem %s1, %s302
        %p304 = scmp.lt.s32.totalorder %s22, 1
        %s305 = scalar_select %p304, %s22, 1
        %s306 = smul.addr %s305, 4
        %s307 = smul.addr %s306, 8
        %s308 = scalar_lea.vmem %s6, %s307
        %v309 = vld [vmem:[%s2] sm:$0xff]
        %v310 = vld [vmem:[%s2 + $0x8] sm:$0x3]
        %v311 = vld [vmem:[%s298] sm:$0xff]
        %v312 = vld [vmem:[%s298 + $0x8] sm:$0xff]
        %v313 = vld [vmem:[%s298 + $0x10] sm:$0xff]
        %v314 = vld [vmem:[%s298 + $0x18] sm:$0xff]
        %v315 = vld [vmem:[%s298 + $0x20] sm:$0xff]
        %v316 = vld [vmem:[%s298 + $0x28] sm:$0xff]
        %v317 = vld [vmem:[%s298 + $0x30] sm:$0x1]
        %v318 = vld [vmem:[%s298 + $0x38] sm:$0x1]
        %v319 = vld [vmem:[%s3] sm:$0xff]
        %v320 = vld [vmem:[%s3 + $0x8] sm:$0xff]
        %v321 = vld [vmem:[%s3 + $0x10] sm:$0x3]
        %v322 = vld [vmem:[%s3 + $0x18] sm:$0x3]
        %vm323 = vcmask 203776
        %v325 = vsel %vm323, %v309, 0
        %v328 = vsel %vm323, %v310, 0
        %vm330 = vcmask 1040384
        %v332 = vsel %vm330, %v317, 0
        %v335 = vsel %vm330, %v318, 0
        %337 = vmatprep.subr.mxu0 %v312
        %338 = vmatpush1.msra.mxu0 %v311
        %339 = vmatprep.subr.mxu0 %v314
        %340 = vmatpush1.msra.mxu0 %v313
        %341 = vmatprep.subr.mxu0 %v316
        %342 = vmatpush1.msra.mxu0 %v315
        %343 = vmatprep.subr.mxu0 %v335
        %344 = vmatpush1.msra.mxu0 %v332
        %345 = vmatprep.subr.mxu0 0.0
        %346 = vmatpush1.msra.mxu0 0.0
        %347 = vmatprep.subr.mxu0 0.0
        %348 = vmatpush1.msra.mxu0 0.0
        %349 = vmatprep.subr.mxu0 0.0
        %350 = vmatpush1.msra.mxu0 0.0
        %351 = vmatprep.subr.mxu0 0.0
        %352 = vmatpush1.msra.mxu0 0.0
        %353 = vmatprep.subr.mxu0 0.0
        %354 = vmatpush1.msra.mxu0 0.0
        %355 = vmatprep.subr.mxu0 0.0
        %356 = vmatpush1.msra.mxu0 0.0
        %357 = vmatprep.subr.mxu0 0.0
        %358 = vmatpush1.msra.mxu0 0.0
        %359 = vmatprep.subr.mxu0 0.0
        %360 = vmatpush1.msra.mxu0 0.0
        %361 = vmatprep.subr.mxu0 0.0
        %362 = vmatpush1.msra.mxu0 0.0
        %363 = vmatprep.subr.mxu0 0.0
        %364 = vmatpush1.msra.mxu0 0.0
        %365 = vmatprep.subr.mxu0 0.0
        %366 = vmatpush1.msra.mxu0 0.0
        %367 = vmatprep.subr.mxu0 0.0
        %368 = vmatpush1.msra.mxu0 0.0
        %369 = vmatprep.subr.mxu0 0.0
        %370 = vmatpush1.msra.mxu0 0.0
        %371 = vmatprep.subr.mxu0 0.0
        %372 = vmatpush1.msra.mxu0 0.0
        %373 = vmatprep.subr.mxu0 0.0
        %374 = vmatpush1.msra.mxu0 0.0
        %375 = vmatprep.subr.mxu0 0.0
        %376 = vmatpush1.msra.mxu0 0.0
        %377 = vmatprep.subr.mxu0 0.0
        %378 = vmatpush1.msra.mxu0 0.0
        %379 = vmatprep.subr.mxu0 0.0
        %380 = vmatpush1.msra.mxu0 0.0
        %381 = vmatprep.subr.mxu0 0.0
        %382 = vmatpush1.msra.mxu0 0.0
        %383 = vmatprep.subr.mxu0 0.0
        %384 = vmatpush1.msra.mxu0 0.0
        %385 = vmatprep.subr.mxu0 0.0
        %386 = vmatpush1.msra.mxu0 0.0
        %387 = vmatprep.subr.mxu0 0.0
        %388 = vmatpush1.msra.mxu0 0.0
        %389 = vmatprep.subr.mxu0 0.0
        %390 = vmatpush1.msra.mxu0 0.0
        %391 = vmatprep.subr.mxu0 0.0
        %392 = vmatpush1.msra.mxu0 0.0
        %393 = vmatprep.subr.mxu0 0.0
        %394 = vmatpush1.msra.mxu0 0.0
        %395 = vmatprep.subr.mxu0 0.0
        %396 = vmatpush1.msra.mxu0 0.0
        %397 = vmatprep.subr.mxu0 0.0
        %398 = vmatpush1.msra.mxu0 0.0
        %399 = vmatprep.subr.mxu0 0.0
        %400 = vmatpush1.msra.mxu0 0.0
        %401 = vmatprep.mubr.f32.mxu0 0.0
        %402 = vmatmul.mubr.f32.gmra.mrb[0].mxu0 %v325
        %v403 = vpop.f32.mrb[0].mxu0
        %v404 = vadd.f32 %v319, %v403
        %v405 = vpop.f32.mrb[0].mxu0
        %v406 = vadd.f32 %v320, %v405
        %407 = vmatprep.mubr.f32.mxu0 0.0
        %408 = vmatmul.mubr.f32.gmra.mrb[0].mxu0 %v328
        %v409 = vpop.f32.mrb[0].mxu0
        %v410 = vadd.f32 %v321, %v409
        %v411 = vpop.f32.mrb[0].mxu0
        %v412 = vadd.f32 %v322, %v411
        %413 = vdwg.mxu0
        %v414 = vmax.f32 %v404, 0.0
        %v415 = vmax.f32 %v406, 0.0
        %v416 = vmax.f32 %v410, 0.0
        %v417 = vmax.f32 %v412, 0.0
        %418 = vst [vmem:[#allocation2] sm:$0xff] 0.0
        %419 = vst [vmem:[#allocation2 + $0x8] sm:$0xff] 0.0
        %420 = vst [vmem:[#allocation2 + $0x10] sm:$0xff] 0.0
        %421 = vst [vmem:[#allocation2 + $0x18] sm:$0xff] 0.0
        %422 = vst [vmem:[#allocation2 + $0x20] sm:$0xff] 0.0
        %423 = vst [vmem:[#allocation2 + $0x28] sm:$0xff] 0.0
        %424 = vst [vmem:[#allocation2 + $0x30] sm:$0xff] 0.0
        %425 = vst [vmem:[#allocation2 + $0x38] sm:$0xff] 0.0
        %426 = vst [vmem:[#allocation2 + $0x40] sm:$0xff] 0.0
        %427 = vst [vmem:[#allocation2 + $0x48] sm:$0xff] 0.0
        %428 = vst [vmem:[#allocation2 + $0x50] sm:$0xff] 0.0
        %429 = vst [vmem:[#allocation2 + $0x58] sm:$0xff] 0.0
        %430 = vst [vmem:[#allocation2 + $0x60] sm:$0xff] 0.0
        %431 = vst [vmem:[#allocation2 + $0x68] sm:$0xff] 0.0
        %432 = vst [vmem:[#allocation2 + $0x70] sm:$0xff] 0.0
        %433 = vst [vmem:[#allocation2 + $0x78] sm:$0xff] 0.0
        %434 = vst [vmem:[#allocation2 + $0x80] sm:$0xff] 0.0
        %435 = vst [vmem:[#allocation2 + $0x88] sm:$0xff] 0.0
        %436 = vst [vmem:[#allocation2 + $0x90] sm:$0xff] 0.0
        %437 = vst [vmem:[#allocation2 + $0x98] sm:$0xff] 0.0
        %438 = vst [vmem:[#allocation2 + $0xa0] sm:$0xff] 0.0
        %439 = vst [vmem:[#allocation2 + $0xa8] sm:$0xff] 0.0
        %440 = vst [vmem:[#allocation2 + $0xb0] sm:$0xff] 0.0
        %441 = vst [vmem:[#allocation2 + $0xb8] sm:$0xff] 0.0
        %442 = vst [vmem:[#allocation2 + $0xc0] sm:$0xff] 0.0
        %443 = vst [vmem:[#allocation2 + $0xc8] sm:$0xff] 0.0
        %444 = vst [vmem:[#allocation2 + $0xd0] sm:$0xff] 0.0
        %445 = vst [vmem:[#allocation2 + $0xd8] sm:$0xff] 0.0
        %446 = vst [vmem:[#allocation2 + $0xe0] sm:$0xff] 0.0
        %447 = vst [vmem:[#allocation2 + $0xe8] sm:$0xff] 0.0
        %448 = vst [vmem:[#allocation2 + $0xf0] sm:$0xff] 0.0
        %449 = vst [vmem:[#allocation2 + $0xf8] sm:$0xff] 0.0
        %450 = vst [vmem:[#allocation2 + $0x100] sm:$0xff] 0.0
        %451 = vst [vmem:[#allocation2 + $0x108] sm:$0xff] 0.0
        %452 = vst [vmem:[#allocation2 + $0x110] sm:$0xff] 0.0
        %453 = vst [vmem:[#allocation2 + $0x118] sm:$0xff] 0.0
        %454 = vst [vmem:[#allocation2 + $0x120] sm:$0xff] 0.0
        %455 = vst [vmem:[#allocation2 + $0x128] sm:$0xff] 0.0
        %456 = vst [vmem:[#allocation2 + $0x130] sm:$0xff] 0.0
        %457 = vst [vmem:[#allocation2 + $0x138] sm:$0xff] 0.0
        %458 = vst [vmem:[#allocation2 + $0x140] sm:$0xff] 0.0
        %459 = vst [vmem:[#allocation2 + $0x148] sm:$0xff] 0.0
        %460 = vst [vmem:[#allocation2 + $0x150] sm:$0xff] 0.0
        %461 = vst [vmem:[#allocation2 + $0x158] sm:$0xff] 0.0
        %462 = vst [vmem:[#allocation2 + $0x160] sm:$0xff] 0.0
        %463 = vst [vmem:[#allocation2 + $0x168] sm:$0xff] 0.0
        %464 = vst [vmem:[#allocation2 + $0x170] sm:$0xff] 0.0
        %465 = vst [vmem:[#allocation2 + $0x178] sm:$0xff] 0.0
        %466 = vst [vmem:[#allocation2 + $0x180] sm:$0xff] 0.0
        %467 = vst [vmem:[#allocation2 + $0x188] sm:$0xff] 0.0
        %468 = vst [vmem:[#allocation2 + $0x190] sm:$0xff] 0.0
        %469 = vst [vmem:[#allocation2 + $0x198] sm:$0xff] 0.0
        %470 = vst [vmem:[#allocation2 + $0x1a0] sm:$0xff] 0.0
        %471 = vst [vmem:[#allocation2 + $0x1a8] sm:$0xff] 0.0
        %472 = vst [vmem:[#allocation2 + $0x1b0] sm:$0xff] 0.0
        %473 = vst [vmem:[#allocation2 + $0x1b8] sm:$0xff] 0.0
        %474 = vst [vmem:[#allocation2 + $0x1c0] sm:$0xff] 0.0
        %475 = vst [vmem:[#allocation2 + $0x1c8] sm:$0xff] 0.0
        %476 = vst [vmem:[#allocation2 + $0x1d0] sm:$0xff] 0.0
        %477 = vst [vmem:[#allocation2 + $0x1d8] sm:$0xff] 0.0
        %478 = vst [vmem:[#allocation2 + $0x1e0] sm:$0xff] 0.0
        %479 = vst [vmem:[#allocation2 + $0x1e8] sm:$0xff] 0.0
        %480 = vst [vmem:[#allocation2 + $0x1f0] sm:$0x3] 0.0
        %481 = vst [vmem:[#allocation2 + $0x1f8] sm:$0x3] 0.0
        %v482 = vlaneseq
        %v483 = vand.u32 %v482, 127
        %v484 = vadd.s32 %v483, 128
        %vm485 = vcmp.lt.s32.totalorder %v483, 0
        %v486 = vsub.s32 0, %v483
        %v487 = vsel %vm485, %v486, %v483
        %v488 = vshrl.u32 %v487, 4
        %v489 = vand.u32 %v487, 15
        %v490 = vsub.s32 0, %v489
        %v491 = vsel %vm485, %v490, %v489
        %vm492 = vcmp.lt.s32.totalorder %v484, 0
        %v493 = vsub.s32 0, %v484
        %v494 = vsel %vm492, %v493, %v484
        %v495 = vshrl.u32 %v494, 4
        %v496 = vand.u32 %v494, 15
        %v497 = vsub.s32 0, %v496
        %v498 = vsel %vm492, %v497, %v496
        %vm499 = vcmp.ne.s32.totalorder %v491, 0
        %vm500 = vcmp.ne.s32.totalorder %v498, 0
        %vm501 = vcmp.lt.s32.totalorder %v491, 0
        %vm502 = vcmp.lt.s32.totalorder %v498, 0
        %vm503 = vmand %vm501, %vm499
        %vm504 = vmand %vm502, %vm500
        %v505 = vadd.s32 %v491, 16
        %v506 = vadd.s32 %v498, 16
        %v507 = vsel %vm503, %v505, %v491
        %v508 = vsel %vm504, %v506, %v498
        %vm509 = vcmp.lt.s32.totalorder %v507, 12
        %vm510 = vcmp.lt.s32.totalorder %v508, 12
        %v511 = vsel %vm509, %v414, 0.0
        %v512 = vsel %vm510, %v415, 0.0
        %v513 = vsel %vm509, %v416, 0.0
        %v514 = vsel %vm510, %v417, 0.0
        %vm515 = vcmp.lt.s32.totalorder %v507, 13
        %vm516 = vcmp.lt.s32.totalorder %v508, 13
        %v517 = vsel %vm515, %v414, 0.0
        %v518 = vsel %vm516, %v415, 0.0
        %v519 = vsel %vm515, %v416, 0.0
        %v520 = vsel %vm516, %v417, 0.0
        %vm521 = vcmp.lt.s32.totalorder %v507, 14
        %vm522 = vcmp.lt.s32.totalorder %v508, 14
        %v523 = vsel %vm521, %v414, 0.0
        %v524 = vsel %vm522, %v415, 0.0
        %v525 = vsel %vm521, %v416, 0.0
        %v526 = vsel %vm522, %v417, 0.0
        %vm527 = vcmp.lt.s32.totalorder %v507, 15
        %vm528 = vcmp.lt.s32.totalorder %v508, 15
        %v529 = vsel %vm527, %v414, 0.0
        %v530 = vsel %vm528, %v415, 0.0
        %v531 = vsel %vm527, %v416, 0.0
        %v532 = vsel %vm528, %v417, 0.0
        %vm533 = vcmp.lt.s32.totalorder %v507, 16
        %vm534 = vcmp.lt.s32.totalorder %v508, 16
        %v535 = vsel %vm533, %v414, 0.0
        %v536 = vsel %vm534, %v415, 0.0
        %v537 = vsel %vm533, %v416, 0.0
        %v538 = vsel %vm534, %v417, 0.0
        %543 = vrot.lane.b32.xlu0 %v511, 68
        %v544 = vpop.permute.xlu0 %543
        %545 = vrot.lane.b32.xlu0 %v512, 68
        %v546 = vpop.permute.xlu0 %545
        %547 = vrot.lane.b32.xlu0 %v513, 68
        %v548 = vpop.permute.xlu0 %547
        %549 = vrot.lane.b32.xlu0 %v514, 68
        %v550 = vpop.permute.xlu0 %549
        %vm551 = vcmask 556032
        %v552 = vsel %vm551, %v544, %v546
        %v553 = vsel %vm551, %v548, %v550
        %vm558 = vcmask 1048096
        %559 = vst.msk [vmem:[#allocation2] sm:$0xff] %vm558, %v544
        %560 = vst [vmem:[#allocation2 + $0x8] sm:$0xff] %v552
        %vm561 = vcmask 1041952
        %562 = vst.msk [vmem:[#allocation2 + $0x10] sm:$0x3] %vm561, %v548
        %563 = vst [vmem:[#allocation2 + $0x18] sm:$0x3] %v553
        %vm568 = vcmask 1041408
        %v569 = vrot.slane %v517, 6
        %v570 = vrot.slane %v518, 6
        %v571 = vrot.slane %v519, 6
        %v572 = vsel %vm568, %v569, %v571
        %v573 = vrot.slane %v520, 6
        %v574 = vsel %vm568, %v570, %v573
        %575 = vrot.lane.b32.xlu0 %v569, 67
        %v576 = vpop.permute.xlu0 %575
        %577 = vrot.lane.b32.xlu0 %v570, 67
        %v578 = vpop.permute.xlu0 %577
        %579 = vrot.lane.b32.xlu0 %v572, 67
        %v580 = vpop.permute.xlu0 %579
        %581 = vrot.lane.b32.xlu0 %v574, 67
        %v582 = vpop.permute.xlu0 %581
        %vm583 = vcmask 547840
        %v584 = vsel %vm583, %v576, %v578
        %v585 = vsel %vm583, %v580, %v582
        %vm590 = vcmask 1048090
        %591 = vst.msk [vmem:[#allocation2 + $0x10] sm:$0xfc] %vm590, %v576
        %592 = vst [vmem:[#allocation2 + $0x18] sm:$0xfc] %v584
        %vm593 = vcmask 1043992
        %594 = vst.msk [vmem:[#allocation2 + $0x20] sm:$0xf] %vm593, %v580
        %595 = vst [vmem:[#allocation2 + $0x28] sm:$0xf] %v585
        %vm600 = vcmask 1043456
        %v601 = vrot.slane %v523, 4
        %v602 = vrot.slane %v524, 4
        %v603 = vrot.slane %v525, 4
        %v604 = vsel %vm600, %v601, %v603
        %v605 = vrot.slane %v526, 4
        %v606 = vsel %vm600, %v602, %v605
        %607 = vrot.lane.b32.xlu0 %v601, 66
        %v608 = vpop.permute.xlu0 %607
        %609 = vrot.lane.b32.xlu0 %v602, 66
        %v610 = vpop.permute.xlu0 %609
        %611 = vrot.lane.b32.xlu0 %v604, 66
        %v612 = vpop.permute.xlu0 %611
        %613 = vrot.lane.b32.xlu0 %v606, 66
        %v614 = vpop.permute.xlu0 %613
        %vm615 = vcmask 539648
        %v616 = vsel %vm615, %v608, %v610
        %v617 = vsel %vm615, %v612, %v614
        %vm622 = vcmask 1048084
        %623 = vst.msk [vmem:[#allocation2 + $0x20] sm:$0xf0] %vm622, %v608
        %624 = vst [vmem:[#allocation2 + $0x28] sm:$0xf0] %v616
        %vm625 = vcmask 1046032
        %626 = vst.msk [vmem:[#allocation2 + $0x30] sm:$0x3f] %vm625, %v612
        %627 = vst [vmem:[#allocation2 + $0x38] sm:$0x3f] %v617
        %vm632 = vcmask 1045504
        %v633 = vrot.slane %v529, 2
        %v634 = vrot.slane %v530, 2
        %v635 = vrot.slane %v531, 2
        %v636 = vsel %vm632, %v633, %v635
        %v637 = vrot.slane %v532, 2
        %v638 = vsel %vm632, %v634, %v637
        %639 = vrot.lane.b32.xlu0 %v633, 65
        %v640 = vpop.permute.xlu0 %639
        %641 = vrot.lane.b32.xlu0 %v634, 65
        %v642 = vpop.permute.xlu0 %641
        %643 = vrot.lane.b32.xlu0 %v636, 65
        %v644 = vpop.permute.xlu0 %643
        %645 = vrot.lane.b32.xlu0 %v638, 65
        %v646 = vpop.permute.xlu0 %645
        %vm647 = vcmask 531456
        %v648 = vsel %vm647, %v640, %v642
        %v649 = vsel %vm647, %v644, %v646
        %vm654 = vcmask 1048078
        %655 = vst.msk [vmem:[#allocation2 + $0x30] sm:$0xc0] %vm654, %v640
        %656 = vst [vmem:[#allocation2 + $0x38] sm:$0xc0] %v648
        %vm657 = vcmask 1048072
        %658 = vst.msk [vmem:[#allocation2 + $0x40] sm:$0xff] %vm657, %v644
        %659 = vst [vmem:[#allocation2 + $0x48] sm:$0xff] %v649
        %664 = vrot.lane.b32.xlu0 %v535, 64
        %v665 = vpop.permute.xlu0 %664
        %666 = vrot.lane.b32.xlu0 %v536, 64
        %v667 = vpop.permute.xlu0 %666
        %668 = vrot.lane.b32.xlu0 %v537, 64
        %v669 = vpop.permute.xlu0 %668
        %670 = vrot.lane.b32.xlu0 %v538, 64
        %v671 = vpop.permute.xlu0 %670
        %vm672 = vcmask 523264
        %v673 = vsel %vm672, %v665, %v667
        %v674 = vsel %vm672, %v669, %v671
        %vm679 = vcmask 1048064
        %680 = vst.msk [vmem:[#allocation2 + $0x50] sm:$0xff] %vm679, %v665
        %681 = vst [vmem:[#allocation2 + $0x58] sm:$0xff] %v673
        %vm682 = vcmask 1041920
        %683 = vst.msk [vmem:[#allocation2 + $0x60] sm:$0x3] %vm682, %v669
        %684 = vst [vmem:[#allocation2 + $0x68] sm:$0x3] %v674
        %v685 = vrot.slane %v511, 6
        %v686 = vrot.slane %v512, 6
        %v687 = vrot.slane %v513, 6
        %v688 = vsel %vm568, %v685, %v687
        %v689 = vrot.slane %v514, 6
        %v690 = vsel %vm568, %v686, %v689
        %691 = vrot.lane.b32.xlu0 %v685, 52
        %v692 = vpop.permute.xlu0 %691
        %693 = vrot.lane.b32.xlu0 %v686, 52
        %v694 = vpop.permute.xlu0 %693
        %695 = vrot.lane.b32.xlu0 %v688, 52
        %v696 = vpop.permute.xlu0 %695
        %697 = vrot.lane.b32.xlu0 %v690, 52
        %v698 = vpop.permute.xlu0 %697
        %vm699 = vcmask 424960
        %v700 = vsel %vm699, %v692, %v694
        %v701 = vsel %vm699, %v696, %v698
        %vm706 = vcmask 1047970
        %707 = vst.msk [vmem:[#allocation2 + $0x60] sm:$0xfc] %vm706, %v692
        %708 = vst [vmem:[#allocation2 + $0x68] sm:$0xfc] %v700
        %vm709 = vcmask 1043872
        %710 = vst.msk [vmem:[#allocation2 + $0x70] sm:$0xf] %vm709, %v696
        %711 = vst [vmem:[#allocation2 + $0x78] sm:$0xf] %v701
        %v712 = vrot.slane %v517, 4
        %v713 = vrot.slane %v518, 4
        %v714 = vrot.slane %v519, 4
        %v715 = vsel %vm600, %v712, %v714
        %v716 = vrot.slane %v520, 4
        %v717 = vsel %vm600, %v713, %v716
        %718 = vrot.lane.b32.xlu0 %v712, 51
        %v719 = vpop.permute.xlu0 %718
        %720 = vrot.lane.b32.xlu0 %v713, 51
        %v721 = vpop.permute.xlu0 %720
        %722 = vrot.lane.b32.xlu0 %v715, 51
        %v723 = vpop.permute.xlu0 %722
        %724 = vrot.lane.b32.xlu0 %v717, 51
        %v725 = vpop.permute.xlu0 %724
        %vm726 = vcmask 416768
        %v727 = vsel %vm726, %v719, %v721
        %v728 = vsel %vm726, %v723, %v725
        %vm733 = vcmask 1047964
        %734 = vst.msk [vmem:[#allocation2 + $0x70] sm:$0xf0] %vm733, %v719
        %735 = vst [vmem:[#allocation2 + $0x78] sm:$0xf0] %v727
        %vm736 = vcmask 1045912
        %737 = vst.msk [vmem:[#allocation2 + $0x80] sm:$0x3f] %vm736, %v723
        %738 = vst [vmem:[#allocation2 + $0x88] sm:$0x3f] %v728
        %v739 = vrot.slane %v523, 2
        %v740 = vrot.slane %v524, 2
        %v741 = vrot.slane %v525, 2
        %v742 = vsel %vm632, %v739, %v741
        %v743 = vrot.slane %v526, 2
        %v744 = vsel %vm632, %v740, %v743
        %745 = vrot.lane.b32.xlu0 %v739, 50
        %v746 = vpop.permute.xlu0 %745
        %747 = vrot.lane.b32.xlu0 %v740, 50
        %v748 = vpop.permute.xlu0 %747
        %749 = vrot.lane.b32.xlu0 %v742, 50
        %v750 = vpop.permute.xlu0 %749
        %751 = vrot.lane.b32.xlu0 %v744, 50
        %v752 = vpop.permute.xlu0 %751
        %vm753 = vcmask 408576
        %v754 = vsel %vm753, %v746, %v748
        %v755 = vsel %vm753, %v750, %v752
        %vm760 = vcmask 1047958
        %761 = vst.msk [vmem:[#allocation2 + $0x80] sm:$0xc0] %vm760, %v746
        %762 = vst [vmem:[#allocation2 + $0x88] sm:$0xc0] %v754
        %vm763 = vcmask 1047952
        %764 = vst.msk [vmem:[#allocation2 + $0x90] sm:$0xff] %vm763, %v750
        %765 = vst [vmem:[#allocation2 + $0x98] sm:$0xff] %v755
        %766 = vrot.lane.b32.xlu0 %v529, 49
        %v767 = vpop.permute.xlu0 %766
        %768 = vrot.lane.b32.xlu0 %v530, 49
        %v769 = vpop.permute.xlu0 %768
        %770 = vrot.lane.b32.xlu0 %v531, 49
        %v771 = vpop.permute.xlu0 %770
        %772 = vrot.lane.b32.xlu0 %v532, 49
        %v773 = vpop.permute.xlu0 %772
        %vm774 = vcmask 400384
        %v775 = vsel %vm774, %v767, %v769
        %v776 = vsel %vm774, %v771, %v773
        %vm781 = vcmask 1047944
        %782 = vst.msk [vmem:[#allocation2 + $0xa0] sm:$0xff] %vm781, %v767
        %783 = vst [vmem:[#allocation2 + $0xa8] sm:$0xff] %v775
        %vm784 = vcmask 1041800
        %785 = vst.msk [vmem:[#allocation2 + $0xb0] sm:$0x3] %vm784, %v771
        %786 = vst [vmem:[#allocation2 + $0xb8] sm:$0x3] %v776
        %v787 = vrot.slane %v535, 6
        %v788 = vrot.slane %v536, 6
        %v789 = vrot.slane %v537, 6
        %v790 = vsel %vm568, %v787, %v789
        %v791 = vrot.slane %v538, 6
        %v792 = vsel %vm568, %v788, %v791
        %793 = vrot.lane.b32.xlu0 %v787, 48
        %v794 = vpop.permute.xlu0 %793
        %795 = vrot.lane.b32.xlu0 %v788, 48
        %v796 = vpop.permute.xlu0 %795
        %797 = vrot.lane.b32.xlu0 %v790, 48
        %v798 = vpop.permute.xlu0 %797
        %799 = vrot.lane.b32.xlu0 %v792, 48
        %v800 = vpop.permute.xlu0 %799
        %vm801 = vcmask 392192
        %v802 = vsel %vm801, %v794, %v796
        %v803 = vsel %vm801, %v798, %v800
        %vm808 = vcmask 1047938
        %809 = vst.msk [vmem:[#allocation2 + $0xb0] sm:$0xfc] %vm808, %v794
        %810 = vst [vmem:[#allocation2 + $0xb8] sm:$0xfc] %v802
        %vm811 = vcmask 1043840
        %812 = vst.msk [vmem:[#allocation2 + $0xc0] sm:$0xf] %vm811, %v798
        %813 = vst [vmem:[#allocation2 + $0xc8] sm:$0xf] %v803
        %v814 = vrot.slane %v511, 4
        %v815 = vrot.slane %v512, 4
        %v816 = vrot.slane %v513, 4
        %v817 = vsel %vm600, %v814, %v816
        %v818 = vrot.slane %v514, 4
        %v819 = vsel %vm600, %v815, %v818
        %820 = vrot.lane.b32.xlu0 %v814, 36
        %v821 = vpop.permute.xlu0 %820
        %822 = vrot.lane.b32.xlu0 %v815, 36
        %v823 = vpop.permute.xlu0 %822
        %824 = vrot.lane.b32.xlu0 %v817, 36
        %v825 = vpop.permute.xlu0 %824
        %826 = vrot.lane.b32.xlu0 %v819, 36
        %v827 = vpop.permute.xlu0 %826
        %vm828 = vcmask 293888
        %v829 = vsel %vm828, %v821, %v823
        %v830 = vsel %vm828, %v825, %v827
        %vm835 = vcmask 1047844
        %836 = vst.msk [vmem:[#allocation2 + $0xc0] sm:$0xf0] %vm835, %v821
        %837 = vst [vmem:[#allocation2 + $0xc8] sm:$0xf0] %v829
        %vm838 = vcmask 1045792
        %839 = vst.msk [vmem:[#allocation2 + $0xd0] sm:$0x3f] %vm838, %v825
        %840 = vst [vmem:[#allocation2 + $0xd8] sm:$0x3f] %v830
        %v841 = vrot.slane %v517, 2
        %v842 = vrot.slane %v518, 2
        %v843 = vrot.slane %v519, 2
        %v844 = vsel %vm632, %v841, %v843
        %v845 = vrot.slane %v520, 2
        %v846 = vsel %vm632, %v842, %v845
        %847 = vrot.lane.b32.xlu0 %v841, 35
        %v848 = vpop.permute.xlu0 %847
        %849 = vrot.lane.b32.xlu0 %v842, 35
        %v850 = vpop.permute.xlu0 %849
        %851 = vrot.lane.b32.xlu0 %v844, 35
        %v852 = vpop.permute.xlu0 %851
        %853 = vrot.lane.b32.xlu0 %v846, 35
        %v854 = vpop.permute.xlu0 %853
        %vm855 = vcmask 285696
        %v856 = vsel %vm855, %v848, %v850
        %v857 = vsel %vm855, %v852, %v854
        %vm862 = vcmask 1047838
        %863 = vst.msk [vmem:[#allocation2 + $0xd0] sm:$0xc0] %vm862, %v848
        %864 = vst [vmem:[#allocation2 + $0xd8] sm:$0xc0] %v856
        %vm865 = vcmask 1047832
        %866 = vst.msk [vmem:[#allocation2 + $0xe0] sm:$0xff] %vm865, %v852
        %867 = vst [vmem:[#allocation2 + $0xe8] sm:$0xff] %v857
        %868 = vrot.lane.b32.xlu0 %v523, 34
        %v869 = vpop.permute.xlu0 %868
        %870 = vrot.lane.b32.xlu0 %v524, 34
        %v871 = vpop.permute.xlu0 %870
        %872 = vrot.lane.b32.xlu0 %v525, 34
        %v873 = vpop.permute.xlu0 %872
        %874 = vrot.lane.b32.xlu0 %v526, 34
        %v875 = vpop.permute.xlu0 %874
        %vm876 = vcmask 277504
        %v877 = vsel %vm876, %v869, %v871
        %v878 = vsel %vm876, %v873, %v875
        %vm883 = vcmask 1047824
        %884 = vst.msk [vmem:[#allocation2 + $0xf0] sm:$0xff] %vm883, %v869
        %885 = vst [vmem:[#allocation2 + $0xf8] sm:$0xff] %v877
        %vm886 = vcmask 1041680
        %887 = vst.msk [vmem:[#allocation2 + $0x100] sm:$0x3] %vm886, %v873
        %888 = vst [vmem:[#allocation2 + $0x108] sm:$0x3] %v878
        %v889 = vrot.slane %v529, 6
        %v890 = vrot.slane %v530, 6
        %v891 = vrot.slane %v531, 6
        %v892 = vsel %vm568, %v889, %v891
        %v893 = vrot.slane %v532, 6
        %v894 = vsel %vm568, %v890, %v893
        %895 = vrot.lane.b32.xlu0 %v889, 33
        %v896 = vpop.permute.xlu0 %895
        %897 = vrot.lane.b32.xlu0 %v890, 33
        %v898 = vpop.permute.xlu0 %897
        %899 = vrot.lane.b32.xlu0 %v892, 33
        %v900 = vpop.permute.xlu0 %899
        %901 = vrot.lane.b32.xlu0 %v894, 33
        %v902 = vpop.permute.xlu0 %901
        %vm903 = vcmask 269312
        %v904 = vsel %vm903, %v896, %v898
        %v905 = vsel %vm903, %v900, %v902
        %vm910 = vcmask 1047818
        %911 = vst.msk [vmem:[#allocation2 + $0x100] sm:$0xfc] %vm910, %v896
        %912 = vst [vmem:[#allocation2 + $0x108] sm:$0xfc] %v904
        %vm913 = vcmask 1043720
        %914 = vst.msk [vmem:[#allocation2 + $0x110] sm:$0xf] %vm913, %v900
        %915 = vst [vmem:[#allocation2 + $0x118] sm:$0xf] %v905
        %v916 = vrot.slane %v535, 4
        %v917 = vrot.slane %v536, 4
        %v918 = vrot.slane %v537, 4
        %v919 = vsel %vm600, %v916, %v918
        %v920 = vrot.slane %v538, 4
        %v921 = vsel %vm600, %v917, %v920
        %922 = vrot.lane.b32.xlu0 %v916, 32
        %v923 = vpop.permute.xlu0 %922
        %924 = vrot.lane.b32.xlu0 %v917, 32
        %v925 = vpop.permute.xlu0 %924
        %926 = vrot.lane.b32.xlu0 %v919, 32
        %v927 = vpop.permute.xlu0 %926
        %928 = vrot.lane.b32.xlu0 %v921, 32
        %v929 = vpop.permute.xlu0 %928
        %vm930 = vcmask 261120
        %v931 = vsel %vm930, %v923, %v925
        %v932 = vsel %vm930, %v927, %v929
        %vm937 = vcmask 1047812
        %938 = vst.msk [vmem:[#allocation2 + $0x110] sm:$0xf0] %vm937, %v923
        %939 = vst [vmem:[#allocation2 + $0x118] sm:$0xf0] %v931
        %vm940 = vcmask 1045760
        %941 = vst.msk [vmem:[#allocation2 + $0x120] sm:$0x3f] %vm940, %v927
        %942 = vst [vmem:[#allocation2 + $0x128] sm:$0x3f] %v932
        %v943 = vrot.slane %v511, 2
        %v944 = vrot.slane %v512, 2
        %v945 = vrot.slane %v513, 2
        %v946 = vsel %vm632, %v943, %v945
        %v947 = vrot.slane %v514, 2
        %v948 = vsel %vm632, %v944, %v947
        %949 = vrot.lane.b32.xlu0 %v943, 20
        %v950 = vpop.permute.xlu0 %949
        %951 = vrot.lane.b32.xlu0 %v944, 20
        %v952 = vpop.permute.xlu0 %951
        %953 = vrot.lane.b32.xlu0 %v946, 20
        %v954 = vpop.permute.xlu0 %953
        %955 = vrot.lane.b32.xlu0 %v948, 20
        %v956 = vpop.permute.xlu0 %955
        %vm957 = vcmask 162816
        %v958 = vsel %vm957, %v950, %v952
        %v959 = vsel %vm957, %v954, %v956
        %vm964 = vcmask 1047718
        %965 = vst.msk [vmem:[#allocation2 + $0x120] sm:$0xc0] %vm964, %v950
        %966 = vst [vmem:[#allocation2 + $0x128] sm:$0xc0] %v958
        %vm967 = vcmask 1047712
        %968 = vst.msk [vmem:[#allocation2 + $0x130] sm:$0xff] %vm967, %v954
        %969 = vst [vmem:[#allocation2 + $0x138] sm:$0xff] %v959
        %970 = vrot.lane.b32.xlu0 %v517, 19
        %v971 = vpop.permute.xlu0 %970
        %972 = vrot.lane.b32.xlu0 %v518, 19
        %v973 = vpop.permute.xlu0 %972
        %974 = vrot.lane.b32.xlu0 %v519, 19
        %v975 = vpop.permute.xlu0 %974
        %976 = vrot.lane.b32.xlu0 %v520, 19
        %v977 = vpop.permute.xlu0 %976
        %vm978 = vcmask 154624
        %v979 = vsel %vm978, %v971, %v973
        %v980 = vsel %vm978, %v975, %v977
        %vm985 = vcmask 1047704
        %986 = vst.msk [vmem:[#allocation2 + $0x140] sm:$0xff] %vm985, %v971
        %987 = vst [vmem:[#allocation2 + $0x148] sm:$0xff] %v979
        %vm988 = vcmask 1041560
        %989 = vst.msk [vmem:[#allocation2 + $0x150] sm:$0x3] %vm988, %v975
        %990 = vst [vmem:[#allocation2 + $0x158] sm:$0x3] %v980
        %v991 = vrot.slane %v523, 6
        %v992 = vrot.slane %v524, 6
        %v993 = vrot.slane %v525, 6
        %v994 = vsel %vm568, %v991, %v993
        %v995 = vrot.slane %v526, 6
        %v996 = vsel %vm568, %v992, %v995
        %997 = vrot.lane.b32.xlu0 %v991, 18
        %v998 = vpop.permute.xlu0 %997
        %999 = vrot.lane.b32.xlu0 %v992, 18
        %v1000 = vpop.permute.xlu0 %999
        %1001 = vrot.lane.b32.xlu0 %v994, 18
        %v1002 = vpop.permute.xlu0 %1001
        %1003 = vrot.lane.b32.xlu0 %v996, 18
        %v1004 = vpop.permute.xlu0 %1003
        %vm1005 = vcmask 146432
        %v1006 = vsel %vm1005, %v998, %v1000
        %v1007 = vsel %vm1005, %v1002, %v1004
        %vm1012 = vcmask 1047698
        %1013 = vst.msk [vmem:[#allocation2 + $0x150] sm:$0xfc] %vm1012, %v998
        %1014 = vst [vmem:[#allocation2 + $0x158] sm:$0xfc] %v1006
        %vm1015 = vcmask 1043600
        %1016 = vst.msk [vmem:[#allocation2 + $0x160] sm:$0xf] %vm1015, %v1002
        %1017 = vst [vmem:[#allocation2 + $0x168] sm:$0xf] %v1007
        %v1018 = vrot.slane %v529, 4
        %v1019 = vrot.slane %v530, 4
        %v1020 = vrot.slane %v531, 4
        %v1021 = vsel %vm600, %v1018, %v1020
        %v1022 = vrot.slane %v532, 4
        %v1023 = vsel %vm600, %v1019, %v1022
        %1024 = vrot.lane.b32.xlu0 %v1018, 17
        %v1025 = vpop.permute.xlu0 %1024
        %1026 = vrot.lane.b32.xlu0 %v1019, 17
        %v1027 = vpop.permute.xlu0 %1026
        %1028 = vrot.lane.b32.xlu0 %v1021, 17
        %v1029 = vpop.permute.xlu0 %1028
        %1030 = vrot.lane.b32.xlu0 %v1023, 17
        %v1031 = vpop.permute.xlu0 %1030
        %vm1032 = vcmask 138240
        %v1033 = vsel %vm1032, %v1025, %v1027
        %v1034 = vsel %vm1032, %v1029, %v1031
        %vm1039 = vcmask 1047692
        %1040 = vst.msk [vmem:[#allocation2 + $0x160] sm:$0xf0] %vm1039, %v1025
        %1041 = vst [vmem:[#allocation2 + $0x168] sm:$0xf0] %v1033
        %vm1042 = vcmask 1045640
        %1043 = vst.msk [vmem:[#allocation2 + $0x170] sm:$0x3f] %vm1042, %v1029
        %1044 = vst [vmem:[#allocation2 + $0x178] sm:$0x3f] %v1034
        %v1045 = vrot.slane %v535, 2
        %v1046 = vrot.slane %v536, 2
        %v1047 = vrot.slane %v537, 2
        %v1048 = vsel %vm632, %v1045, %v1047
        %v1049 = vrot.slane %v538, 2
        %v1050 = vsel %vm632, %v1046, %v1049
        %1051 = vrot.lane.b32.xlu0 %v1045, 16
        %v1052 = vpop.permute.xlu0 %1051
        %1053 = vrot.lane.b32.xlu0 %v1046, 16
        %v1054 = vpop.permute.xlu0 %1053
        %1055 = vrot.lane.b32.xlu0 %v1048, 16
        %v1056 = vpop.permute.xlu0 %1055
        %1057 = vrot.lane.b32.xlu0 %v1050, 16
        %v1058 = vpop.permute.xlu0 %1057
        %vm1059 = vcmask 130048
        %v1060 = vsel %vm1059, %v1052, %v1054
        %v1061 = vsel %vm1059, %v1056, %v1058
        %vm1066 = vcmask 1047686
        %1067 = vst.msk [vmem:[#allocation2 + $0x170] sm:$0xc0] %vm1066, %v1052
        %1068 = vst [vmem:[#allocation2 + $0x178] sm:$0xc0] %v1060
        %vm1069 = vcmask 1047680
        %1070 = vst.msk [vmem:[#allocation2 + $0x180] sm:$0xff] %vm1069, %v1056
        %1071 = vst [vmem:[#allocation2 + $0x188] sm:$0xff] %v1061
        %1072 = vrot.lane.b32.xlu0 %v511, 4
        %v1073 = vpop.permute.xlu0 %1072
        %1074 = vrot.lane.b32.xlu0 %v512, 4
        %v1075 = vpop.permute.xlu0 %1074
        %1076 = vrot.lane.b32.xlu0 %v513, 4
        %v1077 = vpop.permute.xlu0 %1076
        %1078 = vrot.lane.b32.xlu0 %v514, 4
        %v1079 = vpop.permute.xlu0 %1078
        %vm1080 = vcmask 31744
        %v1081 = vsel %vm1080, %v1073, %v1075
        %v1082 = vsel %vm1080, %v1077, %v1079
        %vm1087 = vcmask 1047584
        %1088 = vst.msk [vmem:[#allocation2 + $0x190] sm:$0xff] %vm1087, %v1073
        %1089 = vst [vmem:[#allocation2 + $0x198] sm:$0xff] %v1081
        %vm1090 = vcmask 1041440
        %1091 = vst.msk [vmem:[#allocation2 + $0x1a0] sm:$0x3] %vm1090, %v1077
        %1092 = vst [vmem:[#allocation2 + $0x1a8] sm:$0x3] %v1082
        %1093 = vrot.lane.b32.xlu0 %v569, 3
        %v1094 = vpop.permute.xlu0 %1093
        %1095 = vrot.lane.b32.xlu0 %v570, 3
        %v1096 = vpop.permute.xlu0 %1095
        %1097 = vrot.lane.b32.xlu0 %v572, 3
        %v1098 = vpop.permute.xlu0 %1097
        %1099 = vrot.lane.b32.xlu0 %v574, 3
        %v1100 = vpop.permute.xlu0 %1099
        %vm1101 = vcmask 23552
        %v1102 = vsel %vm1101, %v1094, %v1096
        %v1103 = vsel %vm1101, %v1098, %v1100
        %vm1108 = vcmask 1047578
        %1109 = vst.msk [vmem:[#allocation2 + $0x1a0] sm:$0xfc] %vm1108, %v1094
        %1110 = vst [vmem:[#allocation2 + $0x1a8] sm:$0xfc] %v1102
        %vm1111 = vcmask 1043480
        %1112 = vst.msk [vmem:[#allocation2 + $0x1b0] sm:$0xf] %vm1111, %v1098
        %1113 = vst [vmem:[#allocation2 + $0x1b8] sm:$0xf] %v1103
        %1114 = vrot.lane.b32.xlu0 %v601, 2
        %v1115 = vpop.permute.xlu0 %1114
        %1116 = vrot.lane.b32.xlu0 %v602, 2
        %v1117 = vpop.permute.xlu0 %1116
        %1118 = vrot.lane.b32.xlu0 %v604, 2
        %v1119 = vpop.permute.xlu0 %1118
        %1120 = vrot.lane.b32.xlu0 %v606, 2
        %v1121 = vpop.permute.xlu0 %1120
        %vm1122 = vcmask 15360
        %v1123 = vsel %vm1122, %v1115, %v1117
        %v1124 = vsel %vm1122, %v1119, %v1121
        %vm1129 = vcmask 1047572
        %1130 = vst.msk [vmem:[#allocation2 + $0x1b0] sm:$0xf0] %vm1129, %v1115
        %1131 = vst [vmem:[#allocation2 + $0x1b8] sm:$0xf0] %v1123
        %vm1132 = vcmask 1045520
        %1133 = vst.msk [vmem:[#allocation2 + $0x1c0] sm:$0x3f] %vm1132, %v1119
        %1134 = vst [vmem:[#allocation2 + $0x1c8] sm:$0x3f] %v1124
        %1135 = vrot.lane.b32.xlu0 %v633, 1
        %v1136 = vpop.permute.xlu0 %1135
        %1137 = vrot.lane.b32.xlu0 %v634, 1
        %v1138 = vpop.permute.xlu0 %1137
        %1139 = vrot.lane.b32.xlu0 %v636, 1
        %v1140 = vpop.permute.xlu0 %1139
        %1141 = vrot.lane.b32.xlu0 %v638, 1
        %v1142 = vpop.permute.xlu0 %1141
        %vm1143 = vcmask 7168
        %v1144 = vsel %vm1143, %v1136, %v1138
        %v1145 = vsel %vm1143, %v1140, %v1142
        %vm1150 = vcmask 1047566
        %1151 = vst.msk [vmem:[#allocation2 + $0x1c0] sm:$0xc0] %vm1150, %v1136
        %1152 = vst [vmem:[#allocation2 + $0x1c8] sm:$0xc0] %v1144
        %vm1153 = vcmask 1047560
        %1154 = vst.msk [vmem:[#allocation2 + $0x1d0] sm:$0xff] %vm1153, %v1140
        %1155 = vst [vmem:[#allocation2 + $0x1d8] sm:$0xff] %v1145
        %1156 = vst [vmem:[#allocation2 + $0x1e0] sm:$0xff] %v535
        %1157 = vst [vmem:[#allocation2 + $0x1e8] sm:$0xff] %v536
        %1158 = vst [vmem:[#allocation2 + $0x1f0] sm:$0x3] %v537
        %1159 = vst [vmem:[#allocation2 + $0x1f8] sm:$0x3] %v538
        %v1160 = vld [vmem:[%s4] sm:$0xff]
        %v1161 = vld [vmem:[%s4 + $0x8] sm:$0xff]
        %v1162 = vld [vmem:[%s4 + $0x10] sm:$0xff]
        %v1163 = vld [vmem:[%s4 + $0x18] sm:$0xff]
        %v1164 = vld [vmem:[%s4 + $0x20] sm:$0xf]
        %v1165 = vld [vmem:[%s4 + $0x28] sm:$0xf]
        %v1166 = vld [vmem:[#allocation2] sm:$0xff]
        %v1167 = vld [vmem:[#allocation2 + $0x8] sm:$0xff]
        %v1168 = vld [vmem:[#allocation2 + $0x10] sm:$0xff]
        %v1169 = vld [vmem:[#allocation2 + $0x18] sm:$0xff]
        %v1170 = vld [vmem:[#allocation2 + $0x20] sm:$0xff]
        %v1171 = vld [vmem:[#allocation2 + $0x28] sm:$0xff]
        %v1172 = vld [vmem:[#allocation2 + $0x30] sm:$0xff]
        %v1173 = vld [vmem:[#allocation2 + $0x38] sm:$0xff]
        %v1174 = vld [vmem:[#allocation2 + $0x40] sm:$0xff]
        %v1175 = vld [vmem:[#allocation2 + $0x48] sm:$0xff]
        %v1176 = vld [vmem:[#allocation2 + $0x50] sm:$0xff]
        %v1177 = vld [vmem:[#allocation2 + $0x58] sm:$0xff]
        %v1178 = vld [vmem:[#allocation2 + $0x60] sm:$0xff]
        %v1179 = vld [vmem:[#allocation2 + $0x68] sm:$0xff]
        %v1180 = vld [vmem:[#allocation2 + $0x70] sm:$0xff]
        %v1181 = vld [vmem:[#allocation2 + $0x78] sm:$0xff]
        %v1182 = vld [vmem:[#allocation2 + $0x80] sm:$0xff]
        %v1183 = vld [vmem:[#allocation2 + $0x88] sm:$0xff]
        %v1184 = vld [vmem:[#allocation2 + $0x90] sm:$0xff]
        %v1185 = vld [vmem:[#allocation2 + $0x98] sm:$0xff]
        %v1186 = vld [vmem:[#allocation2 + $0xa0] sm:$0xff]
        %v1187 = vld [vmem:[#allocation2 + $0xa8] sm:$0xff]
        %v1188 = vld [vmem:[#allocation2 + $0xb0] sm:$0xff]
        %v1189 = vld [vmem:[#allocation2 + $0xb8] sm:$0xff]
        %v1190 = vld [vmem:[#allocation2 + $0xc0] sm:$0xff]
        %v1191 = vld [vmem:[#allocation2 + $0xc8] sm:$0xff]
        %v1192 = vld [vmem:[#allocation2 + $0xd0] sm:$0xff]
        %v1193 = vld [vmem:[#allocation2 + $0xd8] sm:$0xff]
        %v1194 = vld [vmem:[#allocation2 + $0xe0] sm:$0xff]
        %v1195 = vld [vmem:[#allocation2 + $0xe8] sm:$0xff]
        %v1196 = vld [vmem:[#allocation2 + $0xf0] sm:$0xff]
        %v1197 = vld [vmem:[#allocation2 + $0xf8] sm:$0xff]
        %v1198 = vld [vmem:[#allocation2 + $0x100] sm:$0xff]
        %v1199 = vld [vmem:[#allocation2 + $0x108] sm:$0xff]
        %v1200 = vld [vmem:[#allocation2 + $0x110] sm:$0xff]
        %v1201 = vld [vmem:[#allocation2 + $0x118] sm:$0xff]
        %v1202 = vld [vmem:[#allocation2 + $0x120] sm:$0xff]
        %v1203 = vld [vmem:[#allocation2 + $0x128] sm:$0xff]
        %v1204 = vld [vmem:[#allocation2 + $0x130] sm:$0xff]
        %v1205 = vld [vmem:[#allocation2 + $0x138] sm:$0xff]
        %v1206 = vld [vmem:[#allocation2 + $0x140] sm:$0xff]
        %v1207 = vld [vmem:[#allocation2 + $0x148] sm:$0xff]
        %v1208 = vld [vmem:[#allocation2 + $0x150] sm:$0xff]
        %v1209 = vld [vmem:[#allocation2 + $0x158] sm:$0xff]
        %v1210 = vld [vmem:[#allocation2 + $0x160] sm:$0xff]
        %v1211 = vld [vmem:[#allocation2 + $0x168] sm:$0xff]
        %v1212 = vld [vmem:[#allocation2 + $0x170] sm:$0xff]
        %v1213 = vld [vmem:[#allocation2 + $0x178] sm:$0xff]
        %v1214 = vld [vmem:[#allocation2 + $0x180] sm:$0xff]
        %v1215 = vld [vmem:[#allocation2 + $0x188] sm:$0xff]
        %v1216 = vld [vmem:[#allocation2 + $0x190] sm:$0xff]
        %v1217 = vld [vmem:[#allocation2 + $0x198] sm:$0xff]
        %v1218 = vld [vmem:[#allocation2 + $0x1a0] sm:$0xff]
        %v1219 = vld [vmem:[#allocation2 + $0x1a8] sm:$0xff]
        %v1220 = vld [vmem:[#allocation2 + $0x1b0] sm:$0xff]
        %v1221 = vld [vmem:[#allocation2 + $0x1b8] sm:$0xff]
        %v1222 = vld [vmem:[#allocation2 + $0x1c0] sm:$0xff]
        %v1223 = vld [vmem:[#allocation2 + $0x1c8] sm:$0xff]
        %v1224 = vld [vmem:[#allocation2 + $0x1d0] sm:$0xff]
        %v1225 = vld [vmem:[#allocation2 + $0x1d8] sm:$0xff]
        %v1226 = vld [vmem:[#allocation2 + $0x1e0] sm:$0xff]
        %v1227 = vld [vmem:[#allocation2 + $0x1e8] sm:$0xff]
        %v1228 = vld [vmem:[#allocation2 + $0x1f0] sm:$0x3]
        %v1229 = vld [vmem:[#allocation2 + $0x1f8] sm:$0x3]
        %v1230 = vld [vmem:[%s5] sm:$0xff]
        %v1231 = vld [vmem:[%s5 + $0x8] sm:$0xff]
        %v1232 = vld [vmem:[%s5 + $0x10] sm:$0xff]
        %v1233 = vld [vmem:[%s5 + $0x18] sm:$0xff]
        %v1234 = vld [vmem:[%s5 + $0x20] sm:$0xf]
        %v1235 = vld [vmem:[%s5 + $0x28] sm:$0xf]
        %vm1236 = vcmask 998400
        %v1238 = vsel %vm1236, %v1161, 0
        %v1241 = vsel %vm1236, %v1163, 0
        %v1244 = vsel %vm1236, %v1165, 0
        %v1247 = vsel %vm568, %v1228, 0
        %v1250 = vsel %vm568, %v1229, 0
        %1252 = vmatprep.subr.mxu0 %v1167
        %1253 = vmatpush1.msra.mxu0 %v1166
        %1254 = vmatprep.subr.mxu0 %v1169
        %1255 = vmatpush1.msra.mxu0 %v1168
        %1256 = vmatprep.subr.mxu0 %v1171
        %1257 = vmatpush1.msra.mxu0 %v1170
        %1258 = vmatprep.subr.mxu0 %v1173
        %1259 = vmatpush1.msra.mxu0 %v1172
        %1260 = vmatprep.subr.mxu0 %v1175
        %1261 = vmatpush1.msra.mxu0 %v1174
        %1262 = vmatprep.subr.mxu0 %v1177
        %1263 = vmatpush1.msra.mxu0 %v1176
        %1264 = vmatprep.subr.mxu0 %v1179
        %1265 = vmatpush1.msra.mxu0 %v1178
        %1266 = vmatprep.subr.mxu0 %v1181
        %1267 = vmatpush1.msra.mxu0 %v1180
        %1268 = vmatprep.subr.mxu0 %v1183
        %1269 = vmatpush1.msra.mxu0 %v1182
        %1270 = vmatprep.subr.mxu0 %v1185
        %1271 = vmatpush1.msra.mxu0 %v1184
        %1272 = vmatprep.subr.mxu0 %v1187
        %1273 = vmatpush1.msra.mxu0 %v1186
        %1274 = vmatprep.subr.mxu0 %v1189
        %1275 = vmatpush1.msra.mxu0 %v1188
        %1276 = vmatprep.subr.mxu0 %v1191
        %1277 = vmatpush1.msra.mxu0 %v1190
        %1278 = vmatprep.subr.mxu0 %v1193
        %1279 = vmatpush1.msra.mxu0 %v1192
        %1280 = vmatprep.subr.mxu0 %v1195
        %1281 = vmatpush1.msra.mxu0 %v1194
        %1282 = vmatprep.subr.mxu0 %v1197
        %1283 = vmatpush1.msra.mxu0 %v1196
        %1284 = vmatprep.subr.mxu0 %v1199
        %1285 = vmatpush1.msra.mxu0 %v1198
        %1286 = vmatprep.subr.mxu0 %v1201
        %1287 = vmatpush1.msra.mxu0 %v1200
        %1288 = vmatprep.subr.mxu0 %v1203
        %1289 = vmatpush1.msra.mxu0 %v1202
        %1290 = vmatprep.subr.mxu0 %v1205
        %1291 = vmatpush1.msra.mxu0 %v1204
        %1292 = vmatprep.subr.mxu0 %v1207
        %1293 = vmatpush1.msra.mxu0 %v1206
        %1294 = vmatprep.subr.mxu0 %v1209
        %1295 = vmatpush1.msra.mxu0 %v1208
        %1296 = vmatprep.subr.mxu0 %v1211
        %1297 = vmatpush1.msra.mxu0 %v1210
        %1298 = vmatprep.subr.mxu0 %v1213
        %1299 = vmatpush1.msra.mxu0 %v1212
        %1300 = vmatprep.subr.mxu0 %v1215
        %1301 = vmatpush1.msra.mxu0 %v1214
        %1302 = vmatprep.subr.mxu0 %v1217
        %1303 = vmatpush1.msra.mxu0 %v1216
        %1304 = vmatprep.subr.mxu0 %v1219
        %1305 = vmatpush1.msra.mxu0 %v1218
        %1306 = vmatprep.subr.mxu0 %v1221
        %1307 = vmatpush1.msra.mxu0 %v1220
        %1308 = vmatprep.subr.mxu0 %v1223
        %1309 = vmatpush1.msra.mxu0 %v1222
        %1310 = vmatprep.subr.mxu0 %v1225
        %1311 = vmatpush1.msra.mxu0 %v1224
        %1312 = vmatprep.subr.mxu0 %v1227
        %1313 = vmatpush1.msra.mxu0 %v1226
        %1314 = vmatprep.subr.mxu0 %v1250
        %1315 = vmatpush1.msra.mxu0 %v1247
        %1316 = vmatprep.mubr.f32.mxu0 %v1238
        %1317 = vmatmul.mubr.f32.gmra.mrb[0].mxu0 %v1160
        %v1318 = vpop.f32.mrb[0].mxu0
        %v1319 = vadd.f32 %v1230, %v1318
        %v1320 = vpop.f32.mrb[0].mxu0
        %v1321 = vadd.f32 %v1231, %v1320
        %1322 = vmatprep.mubr.f32.mxu0 %v1241
        %1323 = vmatmul.mubr.f32.gmra.mrb[0].mxu0 %v1162
        %v1324 = vpop.f32.mrb[0].mxu0
        %v1325 = vadd.f32 %v1232, %v1324
        %v1326 = vpop.f32.mrb[0].mxu0
        %v1327 = vadd.f32 %v1233, %v1326
        %1328 = vmatprep.mubr.f32.mxu0 %v1244
        %1329 = vmatmul.mubr.f32.gmra.mrb[0].mxu0 %v1164
        %v1330 = vpop.f32.mrb[0].mxu0
        %v1331 = vadd.f32 %v1234, %v1330
        %v1332 = vpop.f32.mrb[0].mxu0
        %v1333 = vadd.f32 %v1235, %v1332
        %1334 = vdwg.mxu0
        %vm1335 = vcmp.gt.f32.partialorder %v1325, 20.0
        %vm1336 = vcmp.gt.f32.partialorder %v1327, 20.0
        %vm1337 = vcmp.gt.f32.partialorder %v1331, 20.0
        %vm1338 = vcmp.gt.f32.partialorder %v1333, 20.0
        %v1339 = vmin.f32 %v1325, 20.0
        %v1340 = vmin.f32 %v1327, 20.0
        %v1341 = vmin.f32 %v1331, 20.0
        %v1342 = vmin.f32 %v1333, 20.0
        %v1343 = vmul.f32 %v1339, 1.442695
        %v1344 = vpow.pop %v1343
        %v1345 = vmul.f32 %v1340, 1.442695
        %v1346 = vpow.pop %v1345
        %v1347 = vmul.f32 %v1341, 1.442695
        %v1348 = vpow.pop %v1347
        %v1349 = vmul.f32 %v1342, 1.442695
        %v1350 = vpow.pop %v1349
        %v1351 = vadd.f32 %v1344, 1.0
        %v1352 = vadd.f32 %v1346, 1.0
        %v1353 = vadd.f32 %v1348, 1.0
        %v1354 = vadd.f32 %v1350, 1.0
        %v1355 = vlog2.pop %v1351
        %v1356 = vmul.f32 %v1355, 0.6931472
        %v1357 = vlog2.pop %v1352
        %v1358 = vmul.f32 %v1357, 0.6931472
        %v1359 = vlog2.pop %v1353
        %v1360 = vmul.f32 %v1359, 0.6931472
        %v1361 = vlog2.pop %v1354
        %v1362 = vmul.f32 %v1361, 0.6931472
        %v1363 = vsel %vm1335, %v1325, %v1356
        %v1364 = vsel %vm1336, %v1327, %v1358
        %v1365 = vsel %vm1337, %v1331, %v1360
        %v1366 = vsel %vm1338, %v1333, %v1362
        %v1367 = vld [vmem:[%s303] sm:$0xff]
        %v1368 = vld [vmem:[%s303 + $0x8] sm:$0xff]
        %v1369 = vld [vmem:[%s303 + $0x10] sm:$0x3]
        %v1370 = vld [vmem:[%s303 + $0x18] sm:$0x3]
        %v1375 = vrot.slane %v1367, 6
        %v1376 = vrot.slane %v1368, 6
        %v1377 = vrot.slane %v1369, 6
        %v1378 = vsel %vm568, %v1375, %v1377
        %v1379 = vrot.slane %v1370, 6
        %v1380 = vsel %vm568, %v1376, %v1379
        %v1385 = vmul.f32 %v1363, %v1375
        %v1386 = vmul.f32 %v1364, %v1376
        %v1387 = vmul.f32 %v1365, %v1378
        %v1388 = vmul.f32 %v1366, %v1380
        %v1393 = vrot.slane %v1385, 2
        %v1394 = vrot.slane %v1387, 2
        %v1395 = vsel %vm632, %v1393, %v1394
        %v1396 = vrot.slane %v1386, 2
        %v1397 = vrot.slane %v1388, 2
        %v1398 = vsel %vm632, %v1396, %v1397
        %v1403 = vadd.f32 %v1319, %v1395
        %v1404 = vadd.f32 %v1321, %v1398
        %v1405 = vadd.f32 %v1325, %v1394
        %v1406 = vadd.f32 %v1327, %v1397
        %1407 = vst [vmem:[%s308] sm:$0xff] %v1403
        %1408 = vst [vmem:[%s308 + $0x8] sm:$0xff] %v1404
        %1409 = vst [vmem:[%s308 + $0x10] sm:$0x3] %v1405
        %1410 = vst [vmem:[%s308 + $0x18] sm:$0x3] %v1406
        %v1411 = vmul.f32 %v1367, %v1367
        %v1412 = vmul.f32 %v1368, %v1368
        %v1413 = vmul.f32 %v1369, %v1369
        %v1414 = vmul.f32 %v1370, %v1370
        %v1415 = vmul.f32 %v1411, -0.5
        %v1416 = vmul.f32 %v1412, -0.5
        %v1417 = vmul.f32 %v1413, -0.5
        %v1418 = vmul.f32 %v1414, -0.5
        %v1419 = vlog2.pop %v1363
        %v1420 = vmul.f32 %v1419, 0.6931472
        %v1421 = vlog2.pop %v1364
        %v1422 = vmul.f32 %v1421, 0.6931472
        %v1423 = vlog2.pop %v1365
        %v1424 = vmul.f32 %v1423, 0.6931472
        %v1425 = vlog2.pop %v1366
        %v1426 = vmul.f32 %v1425, 0.6931472
        %v1431 = vrot.slane %v1420, 2
        %v1432 = vrot.slane %v1424, 2
        %v1433 = vsel %vm632, %v1431, %v1432
        %v1434 = vrot.slane %v1422, 2
        %v1435 = vrot.slane %v1426, 2
        %v1436 = vsel %vm632, %v1434, %v1435
        %v1441 = vsub.f32 %v1415, %v1433
        %v1442 = vsub.f32 %v1416, %v1436
        %v1443 = vsub.f32 %v1417, %v1432
        %v1444 = vsub.f32 %v1418, %v1435
        %v1445 = vsub.f32 %v1441, 0.9189385
        %v1446 = vsub.f32 %v1442, 0.9189385
        %v1447 = vsub.f32 %v1443, 0.9189385
        %v1448 = vsub.f32 %v1444, 0.9189385
        %v1449 = vadd.f32 %v1445, %v1446
        %v1450 = vsel %vm568, %v1447, 0.0
        %v1451 = vadd.f32 %v1449, %v1450
        %v1452 = vsel %vm568, %v1448, 0.0
        %v1453 = vadd.f32 %v1451, %v1452
        %1454 = vadd.xlane.f32.xlu0 %v1453
        %v1455 = vpop.xlane.xlu0 %1454
        %v1456 = vrot.slane %v1455, 4
        %v1457 = vadd.f32 %v1455, %v1456
        %v1458 = vrot.slane %v1457, 2
        %v1459 = vadd.f32 %v1457, %v1458
        %v1460 = vrot.slane %v1459, 1
        %v1461 = vadd.f32 %v1459, %v1460
        %s1462 = vtos %v1461
        %v1463 = vstv %s1462
        %1464 = vst [vmem:[%s293] sm:$0x1] %v1463
        %p1465 = scmp.lt.s32.totalorder %s22, 1
        %s1466 = scalar_select %p1465, %s22, 1
        %s1467 = smul.addr %s1466, 4
        %s1468 = smul.addr %s1467, 8
        %s1469 = scalar_lea.vmem %s6, %s1468
        %s1470 = sand.u32 %s192, 1
        %s1471 = scalar_lea.sflag [#allocation4], %s1470
        %s1472 = sand.u32 %s192, 1
        %s1473 = scalar_lea.vmem [#allocation3], %s1472
        // Predicated region
        $region45: #{tpu_custom_call.1} parent=43 // pred_check
          %p1474 = pneg %p176
        $region46: #{tpu_custom_call.1} parent=43 // pred_check_branch
          %1476 = sbr.rel (%p1474) target = $region48
        $region47: #{tpu_custom_call.1} parent=43 // pred_region
          _
        $region48: #{tpu_custom_call.1} parent=43 // pred_fallthru
          _
        // Predicated region
        $region49: #{tpu_custom_call.1} parent=43 // pred_check
          %p1477 = pneg %p202
        $region50: #{tpu_custom_call.1} parent=43 // pred_check_branch
          %1479 = sbr.rel (%p1477) target = $region52
        $region51: #{tpu_custom_call.1} parent=43 // pred_region
          %s1481 = ssub.s32 16, 16
          %1482 = vsyncadd %s1471, %s1481
          %s1483 = smul.addr %s22, 16
          %s1484 = scalar_lea.hbm %s7, %s1483
          %s1486 = sshll.u32 %s1473, 4
          %s1487 = int_to_ptr.vmem [resolvable:$true] %s1486
          %1489 = dma.vmem_to_hbm [thread:$0]  %s1487, 16, %s1484, %s1471
        $region52: #{tpu_custom_call.1} parent=43 // pred_fallthru
          _
      $region44: #{tpu_custom_call.1} parent=5 // pred_fallthru
        _
      %p1490 = scmp.le.s32.totalorder 2, %s17
      // Predicated region
      $region53: #{tpu_custom_call.1} parent=5 // pred_check
        %p1491 = pneg %p1490
      $region54: #{tpu_custom_call.1} parent=5 // pred_check_branch
        %1493 = sbr.rel (%p1491) target = $region56
      $region55: #{tpu_custom_call.1} parent=5 // pred_region
        %s1494 = ssub.s32 %s17, 2
        // Predicated region
        $region57: #{tpu_custom_call.1} parent=55 // pred_check
          %p1495 = pneg %p182
        $region58: #{tpu_custom_call.1} parent=55 // pred_check_branch
          %1497 = sbr.rel (%p1495) target = $region60
        $region59: #{tpu_custom_call.1} parent=55 // pred_region
          %p1498 = scmp.lt.s32.totalorder %s23, 1
          %s1499 = scalar_select %p1498, %s23, 1
          %s1500 = smul.addr %s1499, 4
          %s1501 = smul.addr %s1500, 8
          %s1502 = scalar_lea.vmem %s6, %s1501
        $region60: #{tpu_custom_call.1} parent=55 // pred_fallthru
          _
        // Predicated region
        $region61: #{tpu_custom_call.1} parent=55 // pred_check
          %p1503 = pneg %p208
        $region62: #{tpu_custom_call.1} parent=55 // pred_check_branch
          %1505 = sbr.rel (%p1503) target = $region64
        $region63: #{tpu_custom_call.1} parent=55 // pred_region
          %s1506 = sand.u32 %s193, 1
          %s1507 = scalar_lea.sflag [#allocation4], %s1506
          %s1508 = sand.u32 %s193, 1
          %s1509 = scalar_lea.vmem [#allocation3], %s1508
          %1510 = dma.done %s1507, 16
        $region64: #{tpu_custom_call.1} parent=55 // pred_fallthru
          _
      $region56: #{tpu_custom_call.1} parent=5 // pred_fallthru
        _
    $region6: #{tpu_custom_call.1} parent=1 // loop_footer
      %s21 = sadd.s32 1, %s17
    $region7: #{tpu_custom_call.1} parent=1 // loop_footer_branch
      %16 = sbr.rel target = $region3
    $region8: #{tpu_custom_call.1} parent=1 // loop_exit
      _
    %1511 = vsyncpa [#allocation4], 1
    %s1512 = scalar_lea.sflag [#allocation4], 1
    %1513 = vsyncpa %s1512, 1

</llo_original>
